<compile_context>
chip_gen: v7x
topology: tpu7x:2x2x1
jax: 0.10.0
libtpu: 0.0.40
codegen_flags: <defaults>
</compile_context>

<pallas_src>
from functools import partial

import jax
import jax.numpy as jnp
import numpy as np
from jax.experimental import pallas as pl
from jax.experimental.pallas import tpu as pltpu


class Settings:
    FLAT_DATAPOINTS = 64  # flattened datapoint size for this synthetic instance


BN_EPS = 1e-5
LANE = 128  # TPU lane width — pad every feature dim to this for lane-dense layout


# ----------------------------- Pallas kernel --------------------------------

def _fused_ae_kernel(x_ref, w_ref, b_ref, o_ref):
    """Entire FeedforwardAE forward pass in one kernel.

    x_ref : (B, 64)           real (unpadded) input features
    w_ref : (L, 128, 128)     stacked lane-padded Linear weights
    b_ref : (1, 128)          bias of the final (plain Linear) layer only
    o_ref : (B, 128)          lane-padded output (real columns = first 64)

    Layers 0..L-2 are Linear -> BatchNorm1d(train mode) -> ReLU; their Linear
    biases cancel under z - mean(z) and are omitted.  Layer L-1 is plain
    Linear + bias.  Padded weight rows/cols are zero, so padded activation
    columns stay exactly zero through BN -> ReLU and contribute nothing.
    """
    n_layers = w_ref.shape[0]
    B = x_ref.shape[0]
    k0 = x_ref.shape[1]          # real first-layer contraction width (64)
    inv_b = 1.0 / B              # static

    h = x_ref[...]
    for i in range(n_layers):
        if i == 0:
            w = w_ref[0, :k0, :]     # (64, 128): only the real rows
        else:
            w = w_ref[i]             # (128, 128)
        z = jnp.dot(h, w, preferred_element_type=jnp.float32)
        if i < n_layers - 1:
            # BatchNorm1d training-mode: batch mean, biased batch variance.
            # Single-pass stats: var = E[z^2] - mean^2.
            s1 = jnp.sum(z, axis=0, keepdims=True)
            s2 = jnp.sum(z * z, axis=0, keepdims=True)
            mean = s1 * inv_b
            var = s2 * inv_b - mean * mean
            z = (z - mean) * jax.lax.rsqrt(var + BN_EPS)
            h = jnp.maximum(z, 0.0)  # ReLU
        else:
            h = z + b_ref[...]       # final plain Linear keeps its bias
    o_ref[...] = h.astype(o_ref.dtype)


def feedforward_ae_forward(x, w_stacked, b_last, out_dim):
    """Single fused pallas_call; x is passed unpadded, weights pre-stacked."""
    B = x.shape[0]
    pad_out = w_stacked.shape[-1]

    vmem_spec = pl.BlockSpec(memory_space=pltpu.MemorySpace.VMEM)
    out_padded = pl.pallas_call(
        _fused_ae_kernel,
        out_shape=jax.ShapeDtypeStruct((B, pad_out), jnp.float32),
        in_specs=[vmem_spec, vmem_spec, vmem_spec],
        out_specs=vmem_spec,
    )(x, w_stacked, b_last)

    # Strip lane padding once, at the very end.
    return out_padded[:, :out_dim]


# --------------------------- Model construction -----------------------------

def build_topology(latent_size, hidden_layers, size_mult):
    topology = [Settings.FLAT_DATAPOINTS]
    for x in range(hidden_layers):
        interp = (x + 1) / (hidden_layers + 1)
        topology.append(
            round(
                size_mult * (1 - interp) * max(16, Settings.FLAT_DATAPOINTS)
                + interp * latent_size
            )
        )
    topology.append(latent_size)
    return topology


def init_params(key, latent_size, hidden_layers, size_mult):
    """Unpadded parameters matching the module __init__: encoder layer dims
    followed by decoder (reversed) dims; Linear weights ~ N(0, 0.01), bias 0.
    BN gamma/beta are identity at init and therefore not materialized."""
    topo = build_topology(latent_size, hidden_layers, size_mult)
    dims = topo + list(reversed(topo))[1:]  # encoder chain then decoder chain

    params = []
    for i in range(len(dims) - 1):
        key, sub = jax.random.split(key)
        din, dout = dims[i], dims[i + 1]
        w = 0.01 * jax.random.normal(sub, (din, dout), dtype=jnp.float32)
        b = jnp.zeros((1, dout), jnp.float32)
        params.append((w, b))
    return params


def pack_params(params, lane=LANE):
    """Stack every Linear weight, zero-padded to (lane, lane), into a single
    (n_layers, lane, lane) array (one contiguous DMA).  Only the final layer's
    bias is kept: for BN layers the Linear bias cancels exactly under
    z - mean(z).  Padded rows/cols are zero, so padded activation columns stay
    zero through BN -> ReLU and results on real columns are unchanged."""
    n = len(params)
    w_stacked = jnp.zeros((n, lane, lane), jnp.float32)
    for i, (w, _) in enumerate(params):
        din, dout = w.shape
        w_stacked = w_stacked.at[i, :din, :dout].set(w)
    b_final = params[-1][1]
    b_last = jnp.zeros((1, lane), jnp.float32).at[:, : b_final.shape[-1]].set(b_final)
    return w_stacked, b_last


# ------------------------------ Pure-JAX ref ---------------------------------

def _ref_forward(x, params):
    """Faithful reference: Linear (+bias) -> BN(train, two-pass stats) -> ReLU,
    final layer plain Linear + bias."""
    n = len(params)
    h = x
    for i, (w, b) in enumerate(params):
        z = h @ w + b
        if i < n - 1:
            mean = jnp.mean(z, axis=0, keepdims=True)
            var = jnp.mean((z - mean) ** 2, axis=0, keepdims=True)
            z = (z - mean) * jax.lax.rsqrt(var + BN_EPS)
            z = jnp.maximum(z, 0.0)
        h = z
    return h


# ---------------------------------- Main -------------------------------------

if __name__ == "__main__":
    latent_size, hidden_layers, size_mult = 8, 2, 1.0
    batch = 128  # fill MXU rows; BN is full-batch so no grid split needed

    key = jax.random.PRNGKey(0)
    key, pkey, xkey = jax.random.split(key, 3)

    params = init_params(pkey, latent_size, hidden_layers, size_mult)
    w_stacked, b_last = pack_params(params)
    x = jax.random.normal(xkey, (batch, Settings.FLAT_DATAPOINTS), dtype=jnp.float32)

    fwd = jax.jit(partial(feedforward_ae_forward, out_dim=Settings.FLAT_DATAPOINTS))
    out = jax.block_until_ready(fwd(x, w_stacked, b_last))

    ref = jax.block_until_ready(_ref_forward(x, params))
    assert out.shape == (batch, Settings.FLAT_DATAPOINTS)
    assert np.allclose(np.asarray(out), np.asarray(ref), atol=1e-4, rtol=1e-4)

    # TODO(synk): init_from_checkpoint / prune_model (host-side checkpoint I/O
    # and mask pruning) are not part of the forward pass and are not translated.

    print("KERNEL_OK")
</pallas_src>

<mosaic_0001>
module attributes {stable_mosaic.version = 11 : i64} {
  func.func @_fused_ae_kernel(%arg0: memref<128x64xf32, #tpu.memory_space<vmem>>, %arg1: memref<6x128x128xf32, #tpu.memory_space<vmem>>, %arg2: memref<1x128xf32, #tpu.memory_space<vmem>>, %arg3: memref<128x128xf32, #tpu.memory_space<vmem>>) attributes {dimension_semantics = [], scalar_prefetch = 0 : i64, scratch_operands = 0 : i64, tpu.core_type = #tpu.core_type<tc>} {
    %c0 = arith.constant 0 : index
    %c0_0 = arith.constant 0 : index
    %0 = vector.load %arg0[%c0, %c0_0] : memref<128x64xf32, #tpu.memory_space<vmem>>, vector<128x64xf32>
    %c0_1 = arith.constant 0 : index
    %c0_2 = arith.constant 0 : index
    %c0_3 = arith.constant 0 : index
    %1 = vector.load %arg1[%c0_1, %c0_2, %c0_3] : memref<6x128x128xf32, #tpu.memory_space<vmem>>, vector<1x64x128xf32>
    %2 = vector.shape_cast %1 : vector<1x64x128xf32> to vector<64x128xf32>
    %cst = arith.constant dense<0.000000e+00> : vector<128x128xf32>
    %3 = tpu.matmul %0, %2, %cst {dimension_numbers = #tpu.dot_dimension_numbers<[1], [0], [0], [1], [0, 0, 1, 1], [], []>} : vector<128x64xf32>, vector<64x128xf32>, vector<128x128xf32> -> vector<128x128xf32>
    %cst_4 = arith.constant dense<0.000000e+00> : vector<128xf32>
    %4 = vector.multi_reduction <add>, %3, %cst_4 [0] : vector<128x128xf32> to vector<128xf32>
    %5 = vector.shape_cast %4 : vector<128xf32> to vector<1x128xf32>
    %6 = arith.mulf %3, %3 : vector<128x128xf32>
    %cst_5 = arith.constant dense<0.000000e+00> : vector<128xf32>
    %7 = vector.multi_reduction <add>, %6, %cst_5 [0] : vector<128x128xf32> to vector<128xf32>
    %8 = vector.shape_cast %7 : vector<128xf32> to vector<1x128xf32>
    %cst_6 = arith.constant 7.812500e-03 : f32
    %9 = vector.broadcast %cst_6 : f32 to vector<1x128xf32>
    %10 = arith.mulf %5, %9 : vector<1x128xf32>
    %cst_7 = arith.constant 7.812500e-03 : f32
    %11 = vector.broadcast %cst_7 : f32 to vector<1x128xf32>
    %12 = arith.mulf %8, %11 : vector<1x128xf32>
    %13 = arith.mulf %10, %10 : vector<1x128xf32>
    %14 = arith.subf %12, %13 : vector<1x128xf32>
    %15 = vector.broadcast %10 : vector<1x128xf32> to vector<128x128xf32>
    %16 = arith.subf %3, %15 : vector<128x128xf32>
    %cst_8 = arith.constant 9.99999974E-6 : f32
    %17 = vector.broadcast %cst_8 : f32 to vector<1x128xf32>
    %18 = arith.addf %14, %17 : vector<1x128xf32>
    %19 = math.rsqrt %18 : vector<1x128xf32>
    %20 = vector.broadcast %19 : vector<1x128xf32> to vector<128x128xf32>
    %21 = arith.mulf %16, %20 : vector<128x128xf32>
    %cst_9 = arith.constant 0.000000e+00 : f32
    %22 = vector.broadcast %cst_9 : f32 to vector<128x128xf32>
    %23 = arith.maximumf %21, %22 : vector<128x128xf32>
    %c1 = arith.constant 1 : index
    %c0_10 = arith.constant 0 : index
    %c0_11 = arith.constant 0 : index
    %24 = vector.load %arg1[%c1, %c0_10, %c0_11] : memref<6x128x128xf32, #tpu.memory_space<vmem>>, vector<1x128x128xf32>
    %25 = vector.shape_cast %24 : vector<1x128x128xf32> to vector<128x128xf32>
    %cst_12 = arith.constant dense<0.000000e+00> : vector<128x128xf32>
    %26 = tpu.matmul %23, %25, %cst_12 {dimension_numbers = #tpu.dot_dimension_numbers<[1], [0], [0], [1], [0, 0, 1, 1], [], []>} : vector<128x128xf32>, vector<128x128xf32>, vector<128x128xf32> -> vector<128x128xf32>
    %cst_13 = arith.constant dense<0.000000e+00> : vector<128xf32>
    %27 = vector.multi_reduction <add>, %26, %cst_13 [0] : vector<128x128xf32> to vector<128xf32>
    %28 = vector.shape_cast %27 : vector<128xf32> to vector<1x128xf32>
    %29 = arith.mulf %26, %26 : vector<128x128xf32>
    %cst_14 = arith.constant dense<0.000000e+00> : vector<128xf32>
    %30 = vector.multi_reduction <add>, %29, %cst_14 [0] : vector<128x128xf32> to vector<128xf32>
    %31 = vector.shape_cast %30 : vector<128xf32> to vector<1x128xf32>
    %cst_15 = arith.constant 7.812500e-03 : f32
    %32 = vector.broadcast %cst_15 : f32 to vector<1x128xf32>
    %33 = arith.mulf %28, %32 : vector<1x128xf32>
    %cst_16 = arith.constant 7.812500e-03 : f32
    %34 = vector.broadcast %cst_16 : f32 to vector<1x128xf32>
    %35 = arith.mulf %31, %34 : vector<1x128xf32>
    %36 = arith.mulf %33, %33 : vector<1x128xf32>
    %37 = arith.subf %35, %36 : vector<1x128xf32>
    %38 = vector.broadcast %33 : vector<1x128xf32> to vector<128x128xf32>
    %39 = arith.subf %26, %38 : vector<128x128xf32>
    %cst_17 = arith.constant 9.99999974E-6 : f32
    %40 = vector.broadcast %cst_17 : f32 to vector<1x128xf32>
    %41 = arith.addf %37, %40 : vector<1x128xf32>
    %42 = math.rsqrt %41 : vector<1x128xf32>
    %43 = vector.broadcast %42 : vector<1x128xf32> to vector<128x128xf32>
    %44 = arith.mulf %39, %43 : vector<128x128xf32>
    %cst_18 = arith.constant 0.000000e+00 : f32
    %45 = vector.broadcast %cst_18 : f32 to vector<128x128xf32>
    %46 = arith.maximumf %44, %45 : vector<128x128xf32>
    %c2 = arith.constant 2 : index
    %c0_19 = arith.constant 0 : index
    %c0_20 = arith.constant 0 : index
    %47 = vector.load %arg1[%c2, %c0_19, %c0_20] : memref<6x128x128xf32, #tpu.memory_space<vmem>>, vector<1x128x128xf32>
    %48 = vector.shape_cast %47 : vector<1x128x128xf32> to vector<128x128xf32>
    %cst_21 = arith.constant dense<0.000000e+00> : vector<128x128xf32>
    %49 = tpu.matmul %46, %48, %cst_21 {dimension_numbers = #tpu.dot_dimension_numbers<[1], [0], [0], [1], [0, 0, 1, 1], [], []>} : vector<128x128xf32>, vector<128x128xf32>, vector<128x128xf32> -> vector<128x128xf32>
    %cst_22 = arith.constant dense<0.000000e+00> : vector<128xf32>
    %50 = vector.multi_reduction <add>, %49, %cst_22 [0] : vector<128x128xf32> to vector<128xf32>
    %51 = vector.shape_cast %50 : vector<128xf32> to vector<1x128xf32>
    %52 = arith.mulf %49, %49 : vector<128x128xf32>
    %cst_23 = arith.constant dense<0.000000e+00> : vector<128xf32>
    %53 = vector.multi_reduction <add>, %52, %cst_23 [0] : vector<128x128xf32> to vector<128xf32>
    %54 = vector.shape_cast %53 : vector<128xf32> to vector<1x128xf32>
    %cst_24 = arith.constant 7.812500e-03 : f32
    %55 = vector.broadcast %cst_24 : f32 to vector<1x128xf32>
    %56 = arith.mulf %51, %55 : vector<1x128xf32>
    %cst_25 = arith.constant 7.812500e-03 : f32
    %57 = vector.broadcast %cst_25 : f32 to vector<1x128xf32>
    %58 = arith.mulf %54, %57 : vector<1x128xf32>
    %59 = arith.mulf %56, %56 : vector<1x128xf32>
    %60 = arith.subf %58, %59 : vector<1x128xf32>
    %61 = vector.broadcast %56 : vector<1x128xf32> to vector<128x128xf32>
    %62 = arith.subf %49, %61 : vector<128x128xf32>
    %cst_26 = arith.constant 9.99999974E-6 : f32
    %63 = vector.broadcast %cst_26 : f32 to vector<1x128xf32>
    %64 = arith.addf %60, %63 : vector<1x128xf32>
    %65 = math.rsqrt %64 : vector<1x128xf32>
    %66 = vector.broadcast %65 : vector<1x128xf32> to vector<128x128xf32>
    %67 = arith.mulf %62, %66 : vector<128x128xf32>
    %cst_27 = arith.constant 0.000000e+00 : f32
    %68 = vector.broadcast %cst_27 : f32 to vector<128x128xf32>
    %69 = arith.maximumf %67, %68 : vector<128x128xf32>
    %c3 = arith.constant 3 : index
    %c0_28 = arith.constant 0 : index
    %c0_29 = arith.constant 0 : index
    %70 = vector.load %arg1[%c3, %c0_28, %c0_29] : memref<6x128x128xf32, #tpu.memory_space<vmem>>, vector<1x128x128xf32>
    %71 = vector.shape_cast %70 : vector<1x128x128xf32> to vector<128x128xf32>
    %cst_30 = arith.constant dense<0.000000e+00> : vector<128x128xf32>
    %72 = tpu.matmul %69, %71, %cst_30 {dimension_numbers = #tpu.dot_dimension_numbers<[1], [0], [0], [1], [0, 0, 1, 1], [], []>} : vector<128x128xf32>, vector<128x128xf32>, vector<128x128xf32> -> vector<128x128xf32>
    %cst_31 = arith.constant dense<0.000000e+00> : vector<128xf32>
    %73 = vector.multi_reduction <add>, %72, %cst_31 [0] : vector<128x128xf32> to vector<128xf32>
    %74 = vector.shape_cast %73 : vector<128xf32> to vector<1x128xf32>
    %75 = arith.mulf %72, %72 : vector<128x128xf32>
    %cst_32 = arith.constant dense<0.000000e+00> : vector<128xf32>
    %76 = vector.multi_reduction <add>, %75, %cst_32 [0] : vector<128x128xf32> to vector<128xf32>
    %77 = vector.shape_cast %76 : vector<128xf32> to vector<1x128xf32>
    %cst_33 = arith.constant 7.812500e-03 : f32
    %78 = vector.broadcast %cst_33 : f32 to vector<1x128xf32>
    %79 = arith.mulf %74, %78 : vector<1x128xf32>
    %cst_34 = arith.constant 7.812500e-03 : f32
    %80 = vector.broadcast %cst_34 : f32 to vector<1x128xf32>
    %81 = arith.mulf %77, %80 : vector<1x128xf32>
    %82 = arith.mulf %79, %79 : vector<1x128xf32>
    %83 = arith.subf %81, %82 : vector<1x128xf32>
    %84 = vector.broadcast %79 : vector<1x128xf32> to vector<128x128xf32>
    %85 = arith.subf %72, %84 : vector<128x128xf32>
    %cst_35 = arith.constant 9.99999974E-6 : f32
    %86 = vector.broadcast %cst_35 : f32 to vector<1x128xf32>
    %87 = arith.addf %83, %86 : vector<1x128xf32>
    %88 = math.rsqrt %87 : vector<1x128xf32>
    %89 = vector.broadcast %88 : vector<1x128xf32> to vector<128x128xf32>
    %90 = arith.mulf %85, %89 : vector<128x128xf32>
    %cst_36 = arith.constant 0.000000e+00 : f32
    %91 = vector.broadcast %cst_36 : f32 to vector<128x128xf32>
    %92 = arith.maximumf %90, %91 : vector<128x128xf32>
    %c4 = arith.constant 4 : index
    %c0_37 = arith.constant 0 : index
    %c0_38 = arith.constant 0 : index
    %93 = vector.load %arg1[%c4, %c0_37, %c0_38] : memref<6x128x128xf32, #tpu.memory_space<vmem>>, vector<1x128x128xf32>
    %94 = vector.shape_cast %93 : vector<1x128x128xf32> to vector<128x128xf32>
    %cst_39 = arith.constant dense<0.000000e+00> : vector<128x128xf32>
    %95 = tpu.matmul %92, %94, %cst_39 {dimension_numbers = #tpu.dot_dimension_numbers<[1], [0], [0], [1], [0, 0, 1, 1], [], []>} : vector<128x128xf32>, vector<128x128xf32>, vector<128x128xf32> -> vector<128x128xf32>
    %cst_40 = arith.constant dense<0.000000e+00> : vector<128xf32>
    %96 = vector.multi_reduction <add>, %95, %cst_40 [0] : vector<128x128xf32> to vector<128xf32>
    %97 = vector.shape_cast %96 : vector<128xf32> to vector<1x128xf32>
    %98 = arith.mulf %95, %95 : vector<128x128xf32>
    %cst_41 = arith.constant dense<0.000000e+00> : vector<128xf32>
    %99 = vector.multi_reduction <add>, %98, %cst_41 [0] : vector<128x128xf32> to vector<128xf32>
    %100 = vector.shape_cast %99 : vector<128xf32> to vector<1x128xf32>
    %cst_42 = arith.constant 7.812500e-03 : f32
    %101 = vector.broadcast %cst_42 : f32 to vector<1x128xf32>
    %102 = arith.mulf %97, %101 : vector<1x128xf32>
    %cst_43 = arith.constant 7.812500e-03 : f32
    %103 = vector.broadcast %cst_43 : f32 to vector<1x128xf32>
    %104 = arith.mulf %100, %103 : vector<1x128xf32>
    %105 = arith.mulf %102, %102 : vector<1x128xf32>
    %106 = arith.subf %104, %105 : vector<1x128xf32>
    %107 = vector.broadcast %102 : vector<1x128xf32> to vector<128x128xf32>
    %108 = arith.subf %95, %107 : vector<128x128xf32>
    %cst_44 = arith.constant 9.99999974E-6 : f32
    %109 = vector.broadcast %cst_44 : f32 to vector<1x128xf32>
    %110 = arith.addf %106, %109 : vector<1x128xf32>
    %111 = math.rsqrt %110 : vector<1x128xf32>
    %112 = vector.broadcast %111 : vector<1x128xf32> to vector<128x128xf32>
    %113 = arith.mulf %108, %112 : vector<128x128xf32>
    %cst_45 = arith.constant 0.000000e+00 : f32
    %114 = vector.broadcast %cst_45 : f32 to vector<128x128xf32>
    %115 = arith.maximumf %113, %114 : vector<128x128xf32>
    %c5 = arith.constant 5 : index
    %c0_46 = arith.constant 0 : index
    %c0_47 = arith.constant 0 : index
    %116 = vector.load %arg1[%c5, %c0_46, %c0_47] : memref<6x128x128xf32, #tpu.memory_space<vmem>>, vector<1x128x128xf32>
    %117 = vector.shape_cast %116 : vector<1x128x128xf32> to vector<128x128xf32>
    %cst_48 = arith.constant dense<0.000000e+00> : vector<128x128xf32>
    %118 = tpu.matmul %115, %117, %cst_48 {dimension_numbers = #tpu.dot_dimension_numbers<[1], [0], [0], [1], [0, 0, 1, 1], [], []>} : vector<128x128xf32>, vector<128x128xf32>, vector<128x128xf32> -> vector<128x128xf32>
    %c0_49 = arith.constant 0 : index
    %c0_50 = arith.constant 0 : index
    %119 = vector.load %arg2[%c0_49, %c0_50] : memref<1x128xf32, #tpu.memory_space<vmem>>, vector<1x128xf32>
    %120 = vector.broadcast %119 : vector<1x128xf32> to vector<128x128xf32>
    %121 = arith.addf %118, %120 : vector<128x128xf32>
    %c0_51 = arith.constant 0 : index
    %c0_52 = arith.constant 0 : index
    %122 = vector.load %arg3[%c0_51, %c0_52] : memref<128x128xf32, #tpu.memory_space<vmem>>, vector<128x128xf32>
    tpu.vector_store %arg3[%c0_51, %c0_52], %121 {strides = array<i32>} : memref<128x128xf32, #tpu.memory_space<vmem>>, vector<128x128xf32>,
    return
  }
}

</mosaic_0001>

<llo_original>
// kernel: feedforward_ae_forward.1
$region0: #{feedforward_ae_forward.1}
  #allocation0 [shape = 'u32[]', space=smem, size = 0x4, offset = 0x4, fixed_abs, tag = 'smem constant byte address 0x4 - core index']
  #allocation1 [shape = 'u32[144,128]{1,0:T(1,128)}', space=vmem, size = 0x12000, scoped, tag = 'internal scratch']
  %s0 = inlined_call_operand.vmem [shape: f32[128,64], index: 0, kind: input, shape index: {}]
  %s1 = inlined_call_operand.hbm [shape: f32[6,128,128], index: 1, kind: input, shape index: {}]
  %s2 = inlined_call_operand.vmem [shape: f32[1,128], index: 2, kind: input, shape index: {}]
  %s3 = inlined_call_operand.vmem [shape: f32[128,128], index: 3, kind: output, shape index: {}]
  %s4 = sld [smem:[#allocation0]]
  $region26: #{feedforward_ae_forward.1} parent=0
    _
  %s6 = ssub.s32 1, %s4
  %s7 = scalar_select 0, %s6, %s4
  $region1: #{feedforward_ae_forward.1} parent=0
    #allocation2 [shape = 'u8[393216]{0}', space=vmem, size = 0x60000, scoped, tag = 'input window, operand 1, single buffered']
    #allocation3 [shape = 's32[1]{0}', space=sflag, size = 0x4, scoped, tag = 'scoped memory for feedforward_ae_forward.1']
    %8 = vsyncpa [#allocation3], 0
    // Predicated region
    $region2: #{feedforward_ae_forward.1} parent=1 // pred_check
      _
    $region3: #{feedforward_ae_forward.1} parent=1 // pred_check_branch
      %10 = sbr.rel (0) target = $region5
    $region4: #{feedforward_ae_forward.1} parent=1 // pred_region
      _
    $region5: #{feedforward_ae_forward.1} parent=1 // pred_fallthru
      _
    // Predicated region
    $region6: #{feedforward_ae_forward.1} parent=1 // pred_check
      _
    $region7: #{feedforward_ae_forward.1} parent=1 // pred_check_branch
      %12 = sbr.rel (0) target = $region9
    $region8: #{feedforward_ae_forward.1} parent=1 // pred_region
      %s14 = ssub.s32 12288, 12288
      %15 = vsyncadd [#allocation3], %s14
      %s16 = sshll.u32 [#allocation2], 4
      %s17 = int_to_ptr.vmem [resolvable:$true] %s16
      %22 = dma.hbm_to_vmem [thread:$0]  %s1, 12288, %s17, [#allocation3], 128, 128, 8
    $region9: #{feedforward_ae_forward.1} parent=1 // pred_fallthru
      _
    // Predicated region
    $region10: #{feedforward_ae_forward.1} parent=1 // pred_check
      _
    $region11: #{feedforward_ae_forward.1} parent=1 // pred_check_branch
      %24 = sbr.rel (0) target = $region13
    $region12: #{feedforward_ae_forward.1} parent=1 // pred_region
      _
    $region13: #{feedforward_ae_forward.1} parent=1 // pred_fallthru
      _
    // Predicated region
    $region14: #{feedforward_ae_forward.1} parent=1 // pred_check
      _
    $region15: #{feedforward_ae_forward.1} parent=1 // pred_check_branch
      %26 = sbr.rel (0) target = $region17
    $region16: #{feedforward_ae_forward.1} parent=1 // pred_region
      %27 = dma.done [#allocation3], 12288
    $region17: #{feedforward_ae_forward.1} parent=1 // pred_fallthru
      _
    %v28 = vld [vmem:[%s0] sm:$0xff]
    %v29 = vld [vmem:[%s0 + $0x8] sm:$0xff]
    %v30 = vld [vmem:[%s0 + $0x10] sm:$0xff]
    %v31 = vld [vmem:[%s0 + $0x18] sm:$0xff]
    %v32 = vld [vmem:[%s0 + $0x20] sm:$0xff]
    %v33 = vld [vmem:[%s0 + $0x28] sm:$0xff]
    %v34 = vld [vmem:[%s0 + $0x30] sm:$0xff]
    %v35 = vld [vmem:[%s0 + $0x38] sm:$0xff]
    %v36 = vld [vmem:[%s0 + $0x40] sm:$0xff]
    %v37 = vld [vmem:[%s0 + $0x48] sm:$0xff]
    %v38 = vld [vmem:[%s0 + $0x50] sm:$0xff]
    %v39 = vld [vmem:[%s0 + $0x58] sm:$0xff]
    %v40 = vld [vmem:[%s0 + $0x60] sm:$0xff]
    %v41 = vld [vmem:[%s0 + $0x68] sm:$0xff]
    %v42 = vld [vmem:[%s0 + $0x70] sm:$0xff]
    %v43 = vld [vmem:[%s0 + $0x78] sm:$0xff]
    %v44 = vld [vmem:[#allocation2] sm:$0xff]
    %v45 = vld [vmem:[#allocation2 + $0x8] sm:$0xff]
    %v46 = vld [vmem:[#allocation2 + $0x10] sm:$0xff]
    %v47 = vld [vmem:[#allocation2 + $0x18] sm:$0xff]
    %v48 = vld [vmem:[#allocation2 + $0x20] sm:$0xff]
    %v49 = vld [vmem:[#allocation2 + $0x28] sm:$0xff]
    %v50 = vld [vmem:[#allocation2 + $0x30] sm:$0xff]
    %v51 = vld [vmem:[#allocation2 + $0x38] sm:$0xff]
    %vm52 = vcmask 523264
    %v54 = vsel %vm52, %v28, 0
    %v57 = vsel %vm52, %v29, 0
    %v60 = vsel %vm52, %v30, 0
    %v63 = vsel %vm52, %v31, 0
    %v66 = vsel %vm52, %v32, 0
    %v69 = vsel %vm52, %v33, 0
    %v72 = vsel %vm52, %v34, 0
    %v75 = vsel %vm52, %v35, 0
    %v78 = vsel %vm52, %v36, 0
    %v81 = vsel %vm52, %v37, 0
    %v84 = vsel %vm52, %v38, 0
    %v87 = vsel %vm52, %v39, 0
    %v90 = vsel %vm52, %v40, 0
    %v93 = vsel %vm52, %v41, 0
    %v96 = vsel %vm52, %v42, 0
    %v99 = vsel %vm52, %v43, 0
    %101 = vmatprep.subr.mxu0 0.0
    %102 = vmatpush1.msra.mxu0 %v44
    %103 = vmatprep.subr.mxu0 0.0
    %104 = vmatpush1.msra.mxu0 %v45
    %105 = vmatprep.subr.mxu0 0.0
    %106 = vmatpush1.msra.mxu0 %v46
    %107 = vmatprep.subr.mxu0 0.0
    %108 = vmatpush1.msra.mxu0 %v47
    %109 = vmatprep.subr.mxu0 0.0
    %110 = vmatpush1.msra.mxu0 %v48
    %111 = vmatprep.subr.mxu0 0.0
    %112 = vmatpush1.msra.mxu0 %v49
    %113 = vmatprep.subr.mxu0 0.0
    %114 = vmatpush1.msra.mxu0 %v50
    %115 = vmatprep.subr.mxu0 0.0
    %116 = vmatpush1.msra.mxu0 %v51
    %117 = vmatprep.subr.mxu0 0.0
    %118 = vmatpush1.msra.mxu0 0.0
    %119 = vmatprep.subr.mxu0 0.0
    %120 = vmatpush1.msra.mxu0 0.0
    %121 = vmatprep.subr.mxu0 0.0
    %122 = vmatpush1.msra.mxu0 0.0
    %123 = vmatprep.subr.mxu0 0.0
    %124 = vmatpush1.msra.mxu0 0.0
    %125 = vmatprep.subr.mxu0 0.0
    %126 = vmatpush1.msra.mxu0 0.0
    %127 = vmatprep.subr.mxu0 0.0
    %128 = vmatpush1.msra.mxu0 0.0
    %129 = vmatprep.subr.mxu0 0.0
    %130 = vmatpush1.msra.mxu0 0.0
    %131 = vmatprep.subr.mxu0 0.0
    %132 = vmatpush1.msra.mxu0 0.0
    %133 = vmatprep.subr.mxu0 0.0
    %134 = vmatpush1.msra.mxu0 0.0
    %135 = vmatprep.subr.mxu0 0.0
    %136 = vmatpush1.msra.mxu0 0.0
    %137 = vmatprep.subr.mxu0 0.0
    %138 = vmatpush1.msra.mxu0 0.0
    %139 = vmatprep.subr.mxu0 0.0
    %140 = vmatpush1.msra.mxu0 0.0
    %141 = vmatprep.subr.mxu0 0.0
    %142 = vmatpush1.msra.mxu0 0.0
    %143 = vmatprep.subr.mxu0 0.0
    %144 = vmatpush1.msra.mxu0 0.0
    %145 = vmatprep.subr.mxu0 0.0
    %146 = vmatpush1.msra.mxu0 0.0
    %147 = vmatprep.subr.mxu0 0.0
    %148 = vmatpush1.msra.mxu0 0.0
    %149 = vmatprep.subr.mxu0 0.0
    %150 = vmatpush1.msra.mxu0 0.0
    %151 = vmatprep.subr.mxu0 0.0
    %152 = vmatpush1.msra.mxu0 0.0
    %153 = vmatprep.subr.mxu0 0.0
    %154 = vmatpush1.msra.mxu0 0.0
    %155 = vmatprep.subr.mxu0 0.0
    %156 = vmatpush1.msra.mxu0 0.0
    %157 = vmatprep.subr.mxu0 0.0
    %158 = vmatpush1.msra.mxu0 0.0
    %159 = vmatprep.subr.mxu0 0.0
    %160 = vmatpush1.msra.mxu0 0.0
    %161 = vmatprep.subr.mxu0 0.0
    %162 = vmatpush1.msra.mxu0 0.0
    %163 = vmatprep.subr.mxu0 0.0
    %164 = vmatpush1.msra.mxu0 0.0
    %165 = vmatprep.mubr.f32.mxu0 0.0
    %166 = vmatmul.mubr.f32.gmra.mrb[0].mxu0 %v54
    %v167 = vpop.f32.mrb[0].mxu0
    %v168 = vadd.f32 0.0, %v167
    %v169 = vpop.f32.mrb[0].mxu0
    %170 = vmatprep.mubr.f32.mxu0 0.0
    %171 = vmatmul.mubr.f32.gmra.mrb[0].mxu0 %v57
    %v172 = vpop.f32.mrb[0].mxu0
    %v173 = vadd.f32 0.0, %v172
    %v174 = vpop.f32.mrb[0].mxu0
    %175 = vmatprep.mubr.f32.mxu0 0.0
    %176 = vmatmul.mubr.f32.gmra.mrb[0].mxu0 %v60
    %v177 = vpop.f32.mrb[0].mxu0
    %v178 = vadd.f32 0.0, %v177
    %v179 = vpop.f32.mrb[0].mxu0
    %180 = vmatprep.mubr.f32.mxu0 0.0
    %181 = vmatmul.mubr.f32.gmra.mrb[0].mxu0 %v63
    %v182 = vpop.f32.mrb[0].mxu0
    %v183 = vadd.f32 0.0, %v182
    %v184 = vpop.f32.mrb[0].mxu0
    %185 = vmatprep.mubr.f32.mxu0 0.0
    %186 = vmatmul.mubr.f32.gmra.mrb[0].mxu0 %v66
    %v187 = vpop.f32.mrb[0].mxu0
    %v188 = vadd.f32 0.0, %v187
    %v189 = vpop.f32.mrb[0].mxu0
    %190 = vmatprep.mubr.f32.mxu0 0.0
    %191 = vmatmul.mubr.f32.gmra.mrb[0].mxu0 %v69
    %v192 = vpop.f32.mrb[0].mxu0
    %v193 = vadd.f32 0.0, %v192
    %v194 = vpop.f32.mrb[0].mxu0
    %195 = vmatprep.mubr.f32.mxu0 0.0
    %196 = vmatmul.mubr.f32.gmra.mrb[0].mxu0 %v72
    %v197 = vpop.f32.mrb[0].mxu0
    %v198 = vadd.f32 0.0, %v197
    %v199 = vpop.f32.mrb[0].mxu0
    %200 = vmatprep.mubr.f32.mxu0 0.0
    %201 = vmatmul.mubr.f32.gmra.mrb[0].mxu0 %v75
    %v202 = vpop.f32.mrb[0].mxu0
    %v203 = vadd.f32 0.0, %v202
    %v204 = vpop.f32.mrb[0].mxu0
    %205 = vmatprep.mubr.f32.mxu0 0.0
    %206 = vmatmul.mubr.f32.gmra.mrb[0].mxu0 %v78
    %v207 = vpop.f32.mrb[0].mxu0
    %v208 = vadd.f32 0.0, %v207
    %v209 = vpop.f32.mrb[0].mxu0
    %210 = vmatprep.mubr.f32.mxu0 0.0
    %211 = vmatmul.mubr.f32.gmra.mrb[0].mxu0 %v81
    %v212 = vpop.f32.mrb[0].mxu0
    %v213 = vadd.f32 0.0, %v212
    %v214 = vpop.f32.mrb[0].mxu0
    %215 = vmatprep.mubr.f32.mxu0 0.0
    %216 = vmatmul.mubr.f32.gmra.mrb[0].mxu0 %v84
    %v217 = vpop.f32.mrb[0].mxu0
    %v218 = vadd.f32 0.0, %v217
    %v219 = vpop.f32.mrb[0].mxu0
    %220 = vmatprep.mubr.f32.mxu0 0.0
    %221 = vmatmul.mubr.f32.gmra.mrb[0].mxu0 %v87
    %v222 = vpop.f32.mrb[0].mxu0
    %v223 = vadd.f32 0.0, %v222
    %v224 = vpop.f32.mrb[0].mxu0
    %225 = vmatprep.mubr.f32.mxu0 0.0
    %226 = vmatmul.mubr.f32.gmra.mrb[0].mxu0 %v90
    %v227 = vpop.f32.mrb[0].mxu0
    %v228 = vadd.f32 0.0, %v227
    %v229 = vpop.f32.mrb[0].mxu0
    %230 = vmatprep.mubr.f32.mxu0 0.0
    %231 = vmatmul.mubr.f32.gmra.mrb[0].mxu0 %v93
    %v232 = vpop.f32.mrb[0].mxu0
    %v233 = vadd.f32 0.0, %v232
    %v234 = vpop.f32.mrb[0].mxu0
    %235 = vmatprep.mubr.f32.mxu0 0.0
    %236 = vmatmul.mubr.f32.gmra.mrb[0].mxu0 %v96
    %v237 = vpop.f32.mrb[0].mxu0
    %v238 = vadd.f32 0.0, %v237
    %v239 = vpop.f32.mrb[0].mxu0
    %240 = vmatprep.mubr.f32.mxu0 0.0
    %241 = vmatmul.mubr.f32.gmra.mrb[0].mxu0 %v99
    %v242 = vpop.f32.mrb[0].mxu0
    %v243 = vadd.f32 0.0, %v242
    %v244 = vpop.f32.mrb[0].mxu0
    %245 = vdwg.mxu0
    %v246 = vadd.f32 %v168, %v173
    %v247 = vadd.f32 %v246, %v178
    %v248 = vadd.f32 %v247, %v183
    %v249 = vadd.f32 %v248, %v188
    %v250 = vadd.f32 %v249, %v193
    %v251 = vadd.f32 %v250, %v198
    %v252 = vadd.f32 %v251, %v203
    %v253 = vadd.f32 %v252, %v208
    %v254 = vadd.f32 %v253, %v213
    %v255 = vadd.f32 %v254, %v218
    %v256 = vadd.f32 %v255, %v223
    %v257 = vadd.f32 %v256, %v228
    %v258 = vadd.f32 %v257, %v233
    %v259 = vadd.f32 %v258, %v238
    %v260 = vadd.f32 %v259, %v243
    %v261 = vrot.slane %v260, 4
    %v262 = vadd.f32 %v260, %v261
    %v263 = vrot.slane %v262, 2
    %v264 = vadd.f32 %v262, %v263
    %v265 = vrot.slane %v264, 1
    %v266 = vadd.f32 %v264, %v265
    %v267 = vmul.f32 %v168, %v168
    %v268 = vmul.f32 %v173, %v173
    %v269 = vmul.f32 %v178, %v178
    %v270 = vmul.f32 %v183, %v183
    %v271 = vmul.f32 %v188, %v188
    %v272 = vmul.f32 %v193, %v193
    %v273 = vmul.f32 %v198, %v198
    %v274 = vmul.f32 %v203, %v203
    %v275 = vmul.f32 %v208, %v208
    %v276 = vmul.f32 %v213, %v213
    %v277 = vmul.f32 %v218, %v218
    %v278 = vmul.f32 %v223, %v223
    %v279 = vmul.f32 %v228, %v228
    %v280 = vmul.f32 %v233, %v233
    %v281 = vmul.f32 %v238, %v238
    %v282 = vmul.f32 %v243, %v243
    %v283 = vadd.f32 %v267, %v268
    %v284 = vadd.f32 %v283, %v269
    %v285 = vadd.f32 %v284, %v270
    %v286 = vadd.f32 %v285, %v271
    %v287 = vadd.f32 %v286, %v272
    %v288 = vadd.f32 %v287, %v273
    %v289 = vadd.f32 %v288, %v274
    %v290 = vadd.f32 %v289, %v275
    %v291 = vadd.f32 %v290, %v276
    %v292 = vadd.f32 %v291, %v277
    %v293 = vadd.f32 %v292, %v278
    %v294 = vadd.f32 %v293, %v279
    %v295 = vadd.f32 %v294, %v280
    %v296 = vadd.f32 %v295, %v281
    %v297 = vadd.f32 %v296, %v282
    %v298 = vrot.slane %v297, 4
    %v299 = vadd.f32 %v297, %v298
    %v300 = vrot.slane %v299, 2
    %v301 = vadd.f32 %v299, %v300
    %v302 = vrot.slane %v301, 1
    %v303 = vadd.f32 %v301, %v302
    %v304 = vmul.f32 %v266, 0.0078125
    %v305 = vmul.f32 %v303, 0.0078125
    %v306 = vmul.f32 %v304, %v304
    %v307 = vsub.f32 %v305, %v306
    %v308 = vsub.f32 %v168, %v304
    %v309 = vsub.f32 %v173, %v304
    %v310 = vsub.f32 %v178, %v304
    %v311 = vsub.f32 %v183, %v304
    %v312 = vsub.f32 %v188, %v304
    %v313 = vsub.f32 %v193, %v304
    %v314 = vsub.f32 %v198, %v304
    %v315 = vsub.f32 %v203, %v304
    %v316 = vsub.f32 %v208, %v304
    %v317 = vsub.f32 %v213, %v304
    %v318 = vsub.f32 %v218, %v304
    %v319 = vsub.f32 %v223, %v304
    %v320 = vsub.f32 %v228, %v304
    %v321 = vsub.f32 %v233, %v304
    %v322 = vsub.f32 %v238, %v304
    %v323 = vsub.f32 %v243, %v304
    %v324 = vadd.f32 %v307, 1e-05
    %v325 = vrsqrt.pop %v324
    %v326 = vmul.f32 %v308, %v325
    %v327 = vmul.f32 %v309, %v325
    %v328 = vmul.f32 %v310, %v325
    %v329 = vmul.f32 %v311, %v325
    %v330 = vmul.f32 %v312, %v325
    %v331 = vmul.f32 %v313, %v325
    %v332 = vmul.f32 %v314, %v325
    %v333 = vmul.f32 %v315, %v325
    %v334 = vmul.f32 %v316, %v325
    %v335 = vmul.f32 %v317, %v325
    %v336 = vmul.f32 %v318, %v325
    %v337 = vmul.f32 %v319, %v325
    %v338 = vmul.f32 %v320, %v325
    %v339 = vmul.f32 %v321, %v325
    %v340 = vmul.f32 %v322, %v325
    %v341 = vmul.f32 %v323, %v325
    %v342 = vmax.f32 %v326, 0.0
    %v343 = vmax.f32 %v327, 0.0
    %v344 = vmax.f32 %v328, 0.0
    %v345 = vmax.f32 %v329, 0.0
    %v346 = vmax.f32 %v330, 0.0
    %v347 = vmax.f32 %v331, 0.0
    %v348 = vmax.f32 %v332, 0.0
    %v349 = vmax.f32 %v333, 0.0
    %v350 = vmax.f32 %v334, 0.0
    %v351 = vmax.f32 %v335, 0.0
    %v352 = vmax.f32 %v336, 0.0
    %v353 = vmax.f32 %v337, 0.0
    %v354 = vmax.f32 %v338, 0.0
    %v355 = vmax.f32 %v339, 0.0
    %v356 = vmax.f32 %v340, 0.0
    %v357 = vmax.f32 %v341, 0.0
    %s358 = scalar_lea.vmem [#allocation2], 128
    %v359 = vld [vmem:[%s358] sm:$0xff]
    %v360 = vld [vmem:[%s358 + $0x8] sm:$0xff]
    %v361 = vld [vmem:[%s358 + $0x10] sm:$0xff]
    %v362 = vld [vmem:[%s358 + $0x18] sm:$0xff]
    %v363 = vld [vmem:[%s358 + $0x20] sm:$0xff]
    %v364 = vld [vmem:[%s358 + $0x28] sm:$0xff]
    %v365 = vld [vmem:[%s358 + $0x30] sm:$0xff]
    %v366 = vld [vmem:[%s358 + $0x38] sm:$0xff]
    %v367 = vld [vmem:[%s358 + $0x40] sm:$0xff]
    %v368 = vld [vmem:[%s358 + $0x48] sm:$0xff]
    %v369 = vld [vmem:[%s358 + $0x50] sm:$0xff]
    %v370 = vld [vmem:[%s358 + $0x58] sm:$0xff]
    %v371 = vld [vmem:[%s358 + $0x60] sm:$0xff]
    %v372 = vld [vmem:[%s358 + $0x68] sm:$0xff]
    %v373 = vld [vmem:[%s358 + $0x70] sm:$0xff]
    %v374 = vld [vmem:[%s358 + $0x78] sm:$0xff]
    %375 = vmatprep.subr.mxu0 0.0
    %376 = vmatpush1.msra.mxu0 %v359
    %377 = vmatprep.subr.mxu0 0.0
    %378 = vmatpush1.msra.mxu0 %v360
    %379 = vmatprep.subr.mxu0 0.0
    %380 = vmatpush1.msra.mxu0 %v361
    %381 = vmatprep.subr.mxu0 0.0
    %382 = vmatpush1.msra.mxu0 %v362
    %383 = vmatprep.subr.mxu0 0.0
    %384 = vmatpush1.msra.mxu0 %v363
    %385 = vmatprep.subr.mxu0 0.0
    %386 = vmatpush1.msra.mxu0 %v364
    %387 = vmatprep.subr.mxu0 0.0
    %388 = vmatpush1.msra.mxu0 %v365
    %389 = vmatprep.subr.mxu0 0.0
    %390 = vmatpush1.msra.mxu0 %v366
    %391 = vmatprep.subr.mxu0 0.0
    %392 = vmatpush1.msra.mxu0 %v367
    %393 = vmatprep.subr.mxu0 0.0
    %394 = vmatpush1.msra.mxu0 %v368
    %395 = vmatprep.subr.mxu0 0.0
    %396 = vmatpush1.msra.mxu0 %v369
    %397 = vmatprep.subr.mxu0 0.0
    %398 = vmatpush1.msra.mxu0 %v370
    %399 = vmatprep.subr.mxu0 0.0
    %400 = vmatpush1.msra.mxu0 %v371
    %401 = vmatprep.subr.mxu0 0.0
    %402 = vmatpush1.msra.mxu0 %v372
    %403 = vmatprep.subr.mxu0 0.0
    %404 = vmatpush1.msra.mxu0 %v373
    %405 = vmatprep.subr.mxu0 0.0
    %406 = vmatpush1.msra.mxu0 %v374
    %407 = vmatprep.subr.mxu0 0.0
    %408 = vmatpush1.msra.mxu0 0.0
    %409 = vmatprep.subr.mxu0 0.0
    %410 = vmatpush1.msra.mxu0 0.0
    %411 = vmatprep.subr.mxu0 0.0
    %412 = vmatpush1.msra.mxu0 0.0
    %413 = vmatprep.subr.mxu0 0.0
    %414 = vmatpush1.msra.mxu0 0.0
    %415 = vmatprep.subr.mxu0 0.0
    %416 = vmatpush1.msra.mxu0 0.0
    %417 = vmatprep.subr.mxu0 0.0
    %418 = vmatpush1.msra.mxu0 0.0
    %419 = vmatprep.subr.mxu0 0.0
    %420 = vmatpush1.msra.mxu0 0.0
    %421 = vmatprep.subr.mxu0 0.0
    %422 = vmatpush1.msra.mxu0 0.0
    %423 = vmatprep.subr.mxu0 0.0
    %424 = vmatpush1.msra.mxu0 0.0
    %425 = vmatprep.subr.mxu0 0.0
    %426 = vmatpush1.msra.mxu0 0.0
    %427 = vmatprep.subr.mxu0 0.0
    %428 = vmatpush1.msra.mxu0 0.0
    %429 = vmatprep.subr.mxu0 0.0
    %430 = vmatpush1.msra.mxu0 0.0
    %431 = vmatprep.subr.mxu0 0.0
    %432 = vmatpush1.msra.mxu0 0.0
    %433 = vmatprep.subr.mxu0 0.0
    %434 = vmatpush1.msra.mxu0 0.0
    %435 = vmatprep.subr.mxu0 0.0
    %436 = vmatpush1.msra.mxu0 0.0
    %437 = vmatprep.subr.mxu0 0.0
    %438 = vmatpush1.msra.mxu0 0.0
    %439 = vmatprep.mubr.f32.mxu0 0.0
    %440 = vmatmul.mubr.f32.gmra.mrb[0].mxu0 %v342
    %v441 = vpop.f32.mrb[0].mxu0
    %v442 = vadd.f32 0.0, %v441
    %v443 = vpop.f32.mrb[0].mxu0
    %444 = vmatprep.mubr.f32.mxu0 0.0
    %445 = vmatmul.mubr.f32.gmra.mrb[0].mxu0 %v343
    %v446 = vpop.f32.mrb[0].mxu0
    %v447 = vadd.f32 0.0, %v446
    %v448 = vpop.f32.mrb[0].mxu0
    %449 = vmatprep.mubr.f32.mxu0 0.0
    %450 = vmatmul.mubr.f32.gmra.mrb[0].mxu0 %v344
    %v451 = vpop.f32.mrb[0].mxu0
    %v452 = vadd.f32 0.0, %v451
    %v453 = vpop.f32.mrb[0].mxu0
    %454 = vmatprep.mubr.f32.mxu0 0.0
    %455 = vmatmul.mubr.f32.gmra.mrb[0].mxu0 %v345
    %v456 = vpop.f32.mrb[0].mxu0
    %v457 = vadd.f32 0.0, %v456
    %v458 = vpop.f32.mrb[0].mxu0
    %459 = vmatprep.mubr.f32.mxu0 0.0
    %460 = vmatmul.mubr.f32.gmra.mrb[0].mxu0 %v346
    %v461 = vpop.f32.mrb[0].mxu0
    %v462 = vadd.f32 0.0, %v461
    %v463 = vpop.f32.mrb[0].mxu0
    %464 = vmatprep.mubr.f32.mxu0 0.0
    %465 = vmatmul.mubr.f32.gmra.mrb[0].mxu0 %v347
    %v466 = vpop.f32.mrb[0].mxu0
    %v467 = vadd.f32 0.0, %v466
    %v468 = vpop.f32.mrb[0].mxu0
    %469 = vmatprep.mubr.f32.mxu0 0.0
    %470 = vmatmul.mubr.f32.gmra.mrb[0].mxu0 %v348
    %v471 = vpop.f32.mrb[0].mxu0
    %v472 = vadd.f32 0.0, %v471
    %v473 = vpop.f32.mrb[0].mxu0
    %474 = vmatprep.mubr.f32.mxu0 0.0
    %475 = vmatmul.mubr.f32.gmra.mrb[0].mxu0 %v349
    %v476 = vpop.f32.mrb[0].mxu0
    %v477 = vadd.f32 0.0, %v476
    %v478 = vpop.f32.mrb[0].mxu0
    %479 = vmatprep.mubr.f32.mxu0 0.0
    %480 = vmatmul.mubr.f32.gmra.mrb[0].mxu0 %v350
    %v481 = vpop.f32.mrb[0].mxu0
    %v482 = vadd.f32 0.0, %v481
    %v483 = vpop.f32.mrb[0].mxu0
    %484 = vmatprep.mubr.f32.mxu0 0.0
    %485 = vmatmul.mubr.f32.gmra.mrb[0].mxu0 %v351
    %v486 = vpop.f32.mrb[0].mxu0
    %v487 = vadd.f32 0.0, %v486
    %v488 = vpop.f32.mrb[0].mxu0
    %489 = vmatprep.mubr.f32.mxu0 0.0
    %490 = vmatmul.mubr.f32.gmra.mrb[0].mxu0 %v352
    %v491 = vpop.f32.mrb[0].mxu0
    %v492 = vadd.f32 0.0, %v491
    %v493 = vpop.f32.mrb[0].mxu0
    %494 = vmatprep.mubr.f32.mxu0 0.0
    %495 = vmatmul.mubr.f32.gmra.mrb[0].mxu0 %v353
    %v496 = vpop.f32.mrb[0].mxu0
    %v497 = vadd.f32 0.0, %v496
    %v498 = vpop.f32.mrb[0].mxu0
    %499 = vmatprep.mubr.f32.mxu0 0.0
    %500 = vmatmul.mubr.f32.gmra.mrb[0].mxu0 %v354
    %v501 = vpop.f32.mrb[0].mxu0
    %v502 = vadd.f32 0.0, %v501
    %v503 = vpop.f32.mrb[0].mxu0
    %504 = vmatprep.mubr.f32.mxu0 0.0
    %505 = vmatmul.mubr.f32.gmra.mrb[0].mxu0 %v355
    %v506 = vpop.f32.mrb[0].mxu0
    %v507 = vadd.f32 0.0, %v506
    %v508 = vpop.f32.mrb[0].mxu0
    %509 = vmatprep.mubr.f32.mxu0 0.0
    %510 = vmatmul.mubr.f32.gmra.mrb[0].mxu0 %v356
    %v511 = vpop.f32.mrb[0].mxu0
    %v512 = vadd.f32 0.0, %v511
    %v513 = vpop.f32.mrb[0].mxu0
    %514 = vmatprep.mubr.f32.mxu0 0.0
    %515 = vmatmul.mubr.f32.gmra.mrb[0].mxu0 %v357
    %v516 = vpop.f32.mrb[0].mxu0
    %v517 = vadd.f32 0.0, %v516
    %v518 = vpop.f32.mrb[0].mxu0
    %519 = vdwg.mxu0
    %v520 = vadd.f32 %v442, %v447
    %v521 = vadd.f32 %v520, %v452
    %v522 = vadd.f32 %v521, %v457
    %v523 = vadd.f32 %v522, %v462
    %v524 = vadd.f32 %v523, %v467
    %v525 = vadd.f32 %v524, %v472
    %v526 = vadd.f32 %v525, %v477
    %v527 = vadd.f32 %v526, %v482
    %v528 = vadd.f32 %v527, %v487
    %v529 = vadd.f32 %v528, %v492
    %v530 = vadd.f32 %v529, %v497
    %v531 = vadd.f32 %v530, %v502
    %v532 = vadd.f32 %v531, %v507
    %v533 = vadd.f32 %v532, %v512
    %v534 = vadd.f32 %v533, %v517
    %v535 = vrot.slane %v534, 4
    %v536 = vadd.f32 %v534, %v535
    %v537 = vrot.slane %v536, 2
    %v538 = vadd.f32 %v536, %v537
    %v539 = vrot.slane %v538, 1
    %v540 = vadd.f32 %v538, %v539
    %v541 = vmul.f32 %v442, %v442
    %v542 = vmul.f32 %v447, %v447
    %v543 = vmul.f32 %v452, %v452
    %v544 = vmul.f32 %v457, %v457
    %v545 = vmul.f32 %v462, %v462
    %v546 = vmul.f32 %v467, %v467
    %v547 = vmul.f32 %v472, %v472
    %v548 = vmul.f32 %v477, %v477
    %v549 = vmul.f32 %v482, %v482
    %v550 = vmul.f32 %v487, %v487
    %v551 = vmul.f32 %v492, %v492
    %v552 = vmul.f32 %v497, %v497
    %v553 = vmul.f32 %v502, %v502
    %v554 = vmul.f32 %v507, %v507
    %v555 = vmul.f32 %v512, %v512
    %v556 = vmul.f32 %v517, %v517
    %v557 = vadd.f32 %v541, %v542
    %v558 = vadd.f32 %v557, %v543
    %v559 = vadd.f32 %v558, %v544
    %v560 = vadd.f32 %v559, %v545
    %v561 = vadd.f32 %v560, %v546
    %v562 = vadd.f32 %v561, %v547
    %v563 = vadd.f32 %v562, %v548
    %v564 = vadd.f32 %v563, %v549
    %v565 = vadd.f32 %v564, %v550
    %v566 = vadd.f32 %v565, %v551
    %v567 = vadd.f32 %v566, %v552
    %v568 = vadd.f32 %v567, %v553
    %v569 = vadd.f32 %v568, %v554
    %v570 = vadd.f32 %v569, %v555
    %v571 = vadd.f32 %v570, %v556
    %v572 = vrot.slane %v571, 4
    %v573 = vadd.f32 %v571, %v572
    %v574 = vrot.slane %v573, 2
    %v575 = vadd.f32 %v573, %v574
    %v576 = vrot.slane %v575, 1
    %v577 = vadd.f32 %v575, %v576
    %v578 = vmul.f32 %v540, 0.0078125
    %v579 = vmul.f32 %v577, 0.0078125
    %v580 = vmul.f32 %v578, %v578
    %v581 = vsub.f32 %v579, %v580
    %v582 = vsub.f32 %v442, %v578
    %v583 = vsub.f32 %v447, %v578
    %v584 = vsub.f32 %v452, %v578
    %v585 = vsub.f32 %v457, %v578
    %v586 = vsub.f32 %v462, %v578
    %v587 = vsub.f32 %v467, %v578
    %v588 = vsub.f32 %v472, %v578
    %v589 = vsub.f32 %v477, %v578
    %v590 = vsub.f32 %v482, %v578
    %v591 = vsub.f32 %v487, %v578
    %v592 = vsub.f32 %v492, %v578
    %v593 = vsub.f32 %v497, %v578
    %v594 = vsub.f32 %v502, %v578
    %v595 = vsub.f32 %v507, %v578
    %v596 = vsub.f32 %v512, %v578
    %v597 = vsub.f32 %v517, %v578
    %v598 = vadd.f32 %v581, 1e-05
    %v599 = vrsqrt.pop %v598
    %v600 = vmul.f32 %v582, %v599
    %v601 = vmul.f32 %v583, %v599
    %v602 = vmul.f32 %v584, %v599
    %v603 = vmul.f32 %v585, %v599
    %v604 = vmul.f32 %v586, %v599
    %v605 = vmul.f32 %v587, %v599
    %v606 = vmul.f32 %v588, %v599
    %v607 = vmul.f32 %v589, %v599
    %v608 = vmul.f32 %v590, %v599
    %v609 = vmul.f32 %v591, %v599
    %v610 = vmul.f32 %v592, %v599
    %v611 = vmul.f32 %v593, %v599
    %v612 = vmul.f32 %v594, %v599
    %v613 = vmul.f32 %v595, %v599
    %v614 = vmul.f32 %v596, %v599
    %v615 = vmul.f32 %v597, %v599
    %v616 = vmax.f32 %v600, 0.0
    %v617 = vmax.f32 %v601, 0.0
    %v618 = vmax.f32 %v602, 0.0
    %v619 = vmax.f32 %v603, 0.0
    %v620 = vmax.f32 %v604, 0.0
    %v621 = vmax.f32 %v605, 0.0
    %v622 = vmax.f32 %v606, 0.0
    %v623 = vmax.f32 %v607, 0.0
    %v624 = vmax.f32 %v608, 0.0
    %v625 = vmax.f32 %v609, 0.0
    %v626 = vmax.f32 %v610, 0.0
    %v627 = vmax.f32 %v611, 0.0
    %v628 = vmax.f32 %v612, 0.0
    %v629 = vmax.f32 %v613, 0.0
    %v630 = vmax.f32 %v614, 0.0
    %v631 = vmax.f32 %v615, 0.0
    %s632 = scalar_lea.vmem [#allocation2], 256
    %v633 = vld [vmem:[%s632] sm:$0xff]
    %v634 = vld [vmem:[%s632 + $0x8] sm:$0xff]
    %v635 = vld [vmem:[%s632 + $0x10] sm:$0xff]
    %v636 = vld [vmem:[%s632 + $0x18] sm:$0xff]
    %v637 = vld [vmem:[%s632 + $0x20] sm:$0xff]
    %v638 = vld [vmem:[%s632 + $0x28] sm:$0xff]
    %v639 = vld [vmem:[%s632 + $0x30] sm:$0xff]
    %v640 = vld [vmem:[%s632 + $0x38] sm:$0xff]
    %v641 = vld [vmem:[%s632 + $0x40] sm:$0xff]
    %v642 = vld [vmem:[%s632 + $0x48] sm:$0xff]
    %v643 = vld [vmem:[%s632 + $0x50] sm:$0xff]
    %v644 = vld [vmem:[%s632 + $0x58] sm:$0xff]
    %v645 = vld [vmem:[%s632 + $0x60] sm:$0xff]
    %v646 = vld [vmem:[%s632 + $0x68] sm:$0xff]
    %v647 = vld [vmem:[%s632 + $0x70] sm:$0xff]
    %v648 = vld [vmem:[%s632 + $0x78] sm:$0xff]
    %649 = vmatprep.subr.mxu0 0.0
    %650 = vmatpush1.msra.mxu0 %v633
    %651 = vmatprep.subr.mxu0 0.0
    %652 = vmatpush1.msra.mxu0 %v634
    %653 = vmatprep.subr.mxu0 0.0
    %654 = vmatpush1.msra.mxu0 %v635
    %655 = vmatprep.subr.mxu0 0.0
    %656 = vmatpush1.msra.mxu0 %v636
    %657 = vmatprep.subr.mxu0 0.0
    %658 = vmatpush1.msra.mxu0 %v637
    %659 = vmatprep.subr.mxu0 0.0
    %660 = vmatpush1.msra.mxu0 %v638
    %661 = vmatprep.subr.mxu0 0.0
    %662 = vmatpush1.msra.mxu0 %v639
    %663 = vmatprep.subr.mxu0 0.0
    %664 = vmatpush1.msra.mxu0 %v640
    %665 = vmatprep.subr.mxu0 0.0
    %666 = vmatpush1.msra.mxu0 %v641
    %667 = vmatprep.subr.mxu0 0.0
    %668 = vmatpush1.msra.mxu0 %v642
    %669 = vmatprep.subr.mxu0 0.0
    %670 = vmatpush1.msra.mxu0 %v643
    %671 = vmatprep.subr.mxu0 0.0
    %672 = vmatpush1.msra.mxu0 %v644
    %673 = vmatprep.subr.mxu0 0.0
    %674 = vmatpush1.msra.mxu0 %v645
    %675 = vmatprep.subr.mxu0 0.0
    %676 = vmatpush1.msra.mxu0 %v646
    %677 = vmatprep.subr.mxu0 0.0
    %678 = vmatpush1.msra.mxu0 %v647
    %679 = vmatprep.subr.mxu0 0.0
    %680 = vmatpush1.msra.mxu0 %v648
    %681 = vmatprep.subr.mxu0 0.0
    %682 = vmatpush1.msra.mxu0 0.0
    %683 = vmatprep.subr.mxu0 0.0
    %684 = vmatpush1.msra.mxu0 0.0
    %685 = vmatprep.subr.mxu0 0.0
    %686 = vmatpush1.msra.mxu0 0.0
    %687 = vmatprep.subr.mxu0 0.0
    %688 = vmatpush1.msra.mxu0 0.0
    %689 = vmatprep.subr.mxu0 0.0
    %690 = vmatpush1.msra.mxu0 0.0
    %691 = vmatprep.subr.mxu0 0.0
    %692 = vmatpush1.msra.mxu0 0.0
    %693 = vmatprep.subr.mxu0 0.0
    %694 = vmatpush1.msra.mxu0 0.0
    %695 = vmatprep.subr.mxu0 0.0
    %696 = vmatpush1.msra.mxu0 0.0
    %697 = vmatprep.subr.mxu0 0.0
    %698 = vmatpush1.msra.mxu0 0.0
    %699 = vmatprep.subr.mxu0 0.0
    %700 = vmatpush1.msra.mxu0 0.0
    %701 = vmatprep.subr.mxu0 0.0
    %702 = vmatpush1.msra.mxu0 0.0
    %703 = vmatprep.subr.mxu0 0.0
    %704 = vmatpush1.msra.mxu0 0.0
    %705 = vmatprep.subr.mxu0 0.0
    %706 = vmatpush1.msra.mxu0 0.0
    %707 = vmatprep.subr.mxu0 0.0
    %708 = vmatpush1.msra.mxu0 0.0
    %709 = vmatprep.subr.mxu0 0.0
    %710 = vmatpush1.msra.mxu0 0.0
    %711 = vmatprep.subr.mxu0 0.0
    %712 = vmatpush1.msra.mxu0 0.0
    %713 = vmatprep.mubr.f32.mxu0 0.0
    %714 = vmatmul.mubr.f32.gmra.mrb[0].mxu0 %v616
    %v715 = vpop.f32.mrb[0].mxu0
    %v716 = vadd.f32 0.0, %v715
    %v717 = vpop.f32.mrb[0].mxu0
    %718 = vmatprep.mubr.f32.mxu0 0.0
    %719 = vmatmul.mubr.f32.gmra.mrb[0].mxu0 %v617
    %v720 = vpop.f32.mrb[0].mxu0
    %v721 = vadd.f32 0.0, %v720
    %v722 = vpop.f32.mrb[0].mxu0
    %723 = vmatprep.mubr.f32.mxu0 0.0
    %724 = vmatmul.mubr.f32.gmra.mrb[0].mxu0 %v618
    %v725 = vpop.f32.mrb[0].mxu0
    %v726 = vadd.f32 0.0, %v725
    %v727 = vpop.f32.mrb[0].mxu0
    %728 = vmatprep.mubr.f32.mxu0 0.0
    %729 = vmatmul.mubr.f32.gmra.mrb[0].mxu0 %v619
    %v730 = vpop.f32.mrb[0].mxu0
    %v731 = vadd.f32 0.0, %v730
    %v732 = vpop.f32.mrb[0].mxu0
    %733 = vmatprep.mubr.f32.mxu0 0.0
    %734 = vmatmul.mubr.f32.gmra.mrb[0].mxu0 %v620
    %v735 = vpop.f32.mrb[0].mxu0
    %v736 = vadd.f32 0.0, %v735
    %v737 = vpop.f32.mrb[0].mxu0
    %738 = vmatprep.mubr.f32.mxu0 0.0
    %739 = vmatmul.mubr.f32.gmra.mrb[0].mxu0 %v621
    %v740 = vpop.f32.mrb[0].mxu0
    %v741 = vadd.f32 0.0, %v740
    %v742 = vpop.f32.mrb[0].mxu0
    %743 = vmatprep.mubr.f32.mxu0 0.0
    %744 = vmatmul.mubr.f32.gmra.mrb[0].mxu0 %v622
    %v745 = vpop.f32.mrb[0].mxu0
    %v746 = vadd.f32 0.0, %v745
    %v747 = vpop.f32.mrb[0].mxu0
    %748 = vmatprep.mubr.f32.mxu0 0.0
    %749 = vmatmul.mubr.f32.gmra.mrb[0].mxu0 %v623
    %v750 = vpop.f32.mrb[0].mxu0
    %v751 = vadd.f32 0.0, %v750
    %v752 = vpop.f32.mrb[0].mxu0
    %753 = vmatprep.mubr.f32.mxu0 0.0
    %754 = vmatmul.mubr.f32.gmra.mrb[0].mxu0 %v624
    %v755 = vpop.f32.mrb[0].mxu0
    %v756 = vadd.f32 0.0, %v755
    %v757 = vpop.f32.mrb[0].mxu0
    %758 = vmatprep.mubr.f32.mxu0 0.0
    %759 = vmatmul.mubr.f32.gmra.mrb[0].mxu0 %v625
    %v760 = vpop.f32.mrb[0].mxu0
    %v761 = vadd.f32 0.0, %v760
    %v762 = vpop.f32.mrb[0].mxu0
    %763 = vmatprep.mubr.f32.mxu0 0.0
    %764 = vmatmul.mubr.f32.gmra.mrb[0].mxu0 %v626
    %v765 = vpop.f32.mrb[0].mxu0
    %v766 = vadd.f32 0.0, %v765
    %v767 = vpop.f32.mrb[0].mxu0
    %768 = vmatprep.mubr.f32.mxu0 0.0
    %769 = vmatmul.mubr.f32.gmra.mrb[0].mxu0 %v627
    %v770 = vpop.f32.mrb[0].mxu0
    %v771 = vadd.f32 0.0, %v770
    %v772 = vpop.f32.mrb[0].mxu0
    %773 = vmatprep.mubr.f32.mxu0 0.0
    %774 = vmatmul.mubr.f32.gmra.mrb[0].mxu0 %v628
    %v775 = vpop.f32.mrb[0].mxu0
    %v776 = vadd.f32 0.0, %v775
    %v777 = vpop.f32.mrb[0].mxu0
    %778 = vmatprep.mubr.f32.mxu0 0.0
    %779 = vmatmul.mubr.f32.gmra.mrb[0].mxu0 %v629
    %v780 = vpop.f32.mrb[0].mxu0
    %v781 = vadd.f32 0.0, %v780
    %v782 = vpop.f32.mrb[0].mxu0
    %783 = vmatprep.mubr.f32.mxu0 0.0
    %784 = vmatmul.mubr.f32.gmra.mrb[0].mxu0 %v630
    %v785 = vpop.f32.mrb[0].mxu0
    %v786 = vadd.f32 0.0, %v785
    %v787 = vpop.f32.mrb[0].mxu0
    %788 = vmatprep.mubr.f32.mxu0 0.0
    %789 = vmatmul.mubr.f32.gmra.mrb[0].mxu0 %v631
    %v790 = vpop.f32.mrb[0].mxu0
    %v791 = vadd.f32 0.0, %v790
    %v792 = vpop.f32.mrb[0].mxu0
    %793 = vdwg.mxu0
    %v794 = vadd.f32 %v716, %v721
    %v795 = vadd.f32 %v794, %v726
    %v796 = vadd.f32 %v795, %v731
    %v797 = vadd.f32 %v796, %v736
    %v798 = vadd.f32 %v797, %v741
    %v799 = vadd.f32 %v798, %v746
    %v800 = vadd.f32 %v799, %v751
    %v801 = vadd.f32 %v800, %v756
    %v802 = vadd.f32 %v801, %v761
    %v803 = vadd.f32 %v802, %v766
    %v804 = vadd.f32 %v803, %v771
    %v805 = vadd.f32 %v804, %v776
    %v806 = vadd.f32 %v805, %v781
    %v807 = vadd.f32 %v806, %v786
    %v808 = vadd.f32 %v807, %v791
    %v809 = vrot.slane %v808, 4
    %v810 = vadd.f32 %v808, %v809
    %v811 = vrot.slane %v810, 2
    %v812 = vadd.f32 %v810, %v811
    %v813 = vrot.slane %v812, 1
    %v814 = vadd.f32 %v812, %v813
    %v815 = vmul.f32 %v716, %v716
    %v816 = vmul.f32 %v721, %v721
    %v817 = vmul.f32 %v726, %v726
    %v818 = vmul.f32 %v731, %v731
    %v819 = vmul.f32 %v736, %v736
    %v820 = vmul.f32 %v741, %v741
    %v821 = vmul.f32 %v746, %v746
    %v822 = vmul.f32 %v751, %v751
    %v823 = vmul.f32 %v756, %v756
    %v824 = vmul.f32 %v761, %v761
    %v825 = vmul.f32 %v766, %v766
    %v826 = vmul.f32 %v771, %v771
    %v827 = vmul.f32 %v776, %v776
    %v828 = vmul.f32 %v781, %v781
    %v829 = vmul.f32 %v786, %v786
    %v830 = vmul.f32 %v791, %v791
    %v831 = vadd.f32 %v815, %v816
    %v832 = vadd.f32 %v831, %v817
    %v833 = vadd.f32 %v832, %v818
    %v834 = vadd.f32 %v833, %v819
    %v835 = vadd.f32 %v834, %v820
    %v836 = vadd.f32 %v835, %v821
    %v837 = vadd.f32 %v836, %v822
    %v838 = vadd.f32 %v837, %v823
    %v839 = vadd.f32 %v838, %v824
    %v840 = vadd.f32 %v839, %v825
    %v841 = vadd.f32 %v840, %v826
    %v842 = vadd.f32 %v841, %v827
    %v843 = vadd.f32 %v842, %v828
    %v844 = vadd.f32 %v843, %v829
    %v845 = vadd.f32 %v844, %v830
    %v846 = vrot.slane %v845, 4
    %v847 = vadd.f32 %v845, %v846
    %v848 = vrot.slane %v847, 2
    %v849 = vadd.f32 %v847, %v848
    %v850 = vrot.slane %v849, 1
    %v851 = vadd.f32 %v849, %v850
    %v852 = vmul.f32 %v814, 0.0078125
    %v853 = vmul.f32 %v851, 0.0078125
    %v854 = vmul.f32 %v852, %v852
    %v855 = vsub.f32 %v853, %v854
    %v856 = vsub.f32 %v716, %v852
    %v857 = vsub.f32 %v721, %v852
    %v858 = vsub.f32 %v726, %v852
    %v859 = vsub.f32 %v731, %v852
    %v860 = vsub.f32 %v736, %v852
    %v861 = vsub.f32 %v741, %v852
    %v862 = vsub.f32 %v746, %v852
    %v863 = vsub.f32 %v751, %v852
    %v864 = vsub.f32 %v756, %v852
    %v865 = vsub.f32 %v761, %v852
    %v866 = vsub.f32 %v766, %v852
    %v867 = vsub.f32 %v771, %v852
    %v868 = vsub.f32 %v776, %v852
    %v869 = vsub.f32 %v781, %v852
    %v870 = vsub.f32 %v786, %v852
    %v871 = vsub.f32 %v791, %v852
    %v872 = vadd.f32 %v855, 1e-05
    %v873 = vrsqrt.pop %v872
    %v874 = vmul.f32 %v856, %v873
    %v875 = vmul.f32 %v857, %v873
    %v876 = vmul.f32 %v858, %v873
    %v877 = vmul.f32 %v859, %v873
    %v878 = vmul.f32 %v860, %v873
    %v879 = vmul.f32 %v861, %v873
    %v880 = vmul.f32 %v862, %v873
    %v881 = vmul.f32 %v863, %v873
    %v882 = vmul.f32 %v864, %v873
    %v883 = vmul.f32 %v865, %v873
    %v884 = vmul.f32 %v866, %v873
    %v885 = vmul.f32 %v867, %v873
    %v886 = vmul.f32 %v868, %v873
    %v887 = vmul.f32 %v869, %v873
    %v888 = vmul.f32 %v870, %v873
    %v889 = vmul.f32 %v871, %v873
    %v890 = vmax.f32 %v874, 0.0
    %v891 = vmax.f32 %v875, 0.0
    %v892 = vmax.f32 %v876, 0.0
    %v893 = vmax.f32 %v877, 0.0
    %v894 = vmax.f32 %v878, 0.0
    %v895 = vmax.f32 %v879, 0.0
    %v896 = vmax.f32 %v880, 0.0
    %v897 = vmax.f32 %v881, 0.0
    %v898 = vmax.f32 %v882, 0.0
    %v899 = vmax.f32 %v883, 0.0
    %v900 = vmax.f32 %v884, 0.0
    %v901 = vmax.f32 %v885, 0.0
    %v902 = vmax.f32 %v886, 0.0
    %v903 = vmax.f32 %v887, 0.0
    %v904 = vmax.f32 %v888, 0.0
    %v905 = vmax.f32 %v889, 0.0
    %s906 = scalar_lea.vmem [#allocation2], 384
    %v907 = vld [vmem:[%s906] sm:$0xff]
    %v908 = vld [vmem:[%s906 + $0x8] sm:$0xff]
    %v909 = vld [vmem:[%s906 + $0x10] sm:$0xff]
    %v910 = vld [vmem:[%s906 + $0x18] sm:$0xff]
    %v911 = vld [vmem:[%s906 + $0x20] sm:$0xff]
    %v912 = vld [vmem:[%s906 + $0x28] sm:$0xff]
    %v913 = vld [vmem:[%s906 + $0x30] sm:$0xff]
    %v914 = vld [vmem:[%s906 + $0x38] sm:$0xff]
    %v915 = vld [vmem:[%s906 + $0x40] sm:$0xff]
    %v916 = vld [vmem:[%s906 + $0x48] sm:$0xff]
    %v917 = vld [vmem:[%s906 + $0x50] sm:$0xff]
    %v918 = vld [vmem:[%s906 + $0x58] sm:$0xff]
    %v919 = vld [vmem:[%s906 + $0x60] sm:$0xff]
    %v920 = vld [vmem:[%s906 + $0x68] sm:$0xff]
    %v921 = vld [vmem:[%s906 + $0x70] sm:$0xff]
    %v922 = vld [vmem:[%s906 + $0x78] sm:$0xff]
    %923 = vmatprep.subr.mxu0 0.0
    %924 = vmatpush1.msra.mxu0 %v907
    %925 = vmatprep.subr.mxu0 0.0
    %926 = vmatpush1.msra.mxu0 %v908
    %927 = vmatprep.subr.mxu0 0.0
    %928 = vmatpush1.msra.mxu0 %v909
    %929 = vmatprep.subr.mxu0 0.0
    %930 = vmatpush1.msra.mxu0 %v910
    %931 = vmatprep.subr.mxu0 0.0
    %932 = vmatpush1.msra.mxu0 %v911
    %933 = vmatprep.subr.mxu0 0.0
    %934 = vmatpush1.msra.mxu0 %v912
    %935 = vmatprep.subr.mxu0 0.0
    %936 = vmatpush1.msra.mxu0 %v913
    %937 = vmatprep.subr.mxu0 0.0
    %938 = vmatpush1.msra.mxu0 %v914
    %939 = vmatprep.subr.mxu0 0.0
    %940 = vmatpush1.msra.mxu0 %v915
    %941 = vmatprep.subr.mxu0 0.0
    %942 = vmatpush1.msra.mxu0 %v916
    %943 = vmatprep.subr.mxu0 0.0
    %944 = vmatpush1.msra.mxu0 %v917
    %945 = vmatprep.subr.mxu0 0.0
    %946 = vmatpush1.msra.mxu0 %v918
    %947 = vmatprep.subr.mxu0 0.0
    %948 = vmatpush1.msra.mxu0 %v919
    %949 = vmatprep.subr.mxu0 0.0
    %950 = vmatpush1.msra.mxu0 %v920
    %951 = vmatprep.subr.mxu0 0.0
    %952 = vmatpush1.msra.mxu0 %v921
    %953 = vmatprep.subr.mxu0 0.0
    %954 = vmatpush1.msra.mxu0 %v922
    %955 = vmatprep.subr.mxu0 0.0
    %956 = vmatpush1.msra.mxu0 0.0
    %957 = vmatprep.subr.mxu0 0.0
    %958 = vmatpush1.msra.mxu0 0.0
    %959 = vmatprep.subr.mxu0 0.0
    %960 = vmatpush1.msra.mxu0 0.0
    %961 = vmatprep.subr.mxu0 0.0
    %962 = vmatpush1.msra.mxu0 0.0
    %963 = vmatprep.subr.mxu0 0.0
    %964 = vmatpush1.msra.mxu0 0.0
    %965 = vmatprep.subr.mxu0 0.0
    %966 = vmatpush1.msra.mxu0 0.0
    %967 = vmatprep.subr.mxu0 0.0
    %968 = vmatpush1.msra.mxu0 0.0
    %969 = vmatprep.subr.mxu0 0.0
    %970 = vmatpush1.msra.mxu0 0.0
    %971 = vmatprep.subr.mxu0 0.0
    %972 = vmatpush1.msra.mxu0 0.0
    %973 = vmatprep.subr.mxu0 0.0
    %974 = vmatpush1.msra.mxu0 0.0
    %975 = vmatprep.subr.mxu0 0.0
    %976 = vmatpush1.msra.mxu0 0.0
    %977 = vmatprep.subr.mxu0 0.0
    %978 = vmatpush1.msra.mxu0 0.0
    %979 = vmatprep.subr.mxu0 0.0
    %980 = vmatpush1.msra.mxu0 0.0
    %981 = vmatprep.subr.mxu0 0.0
    %982 = vmatpush1.msra.mxu0 0.0
    %983 = vmatprep.subr.mxu0 0.0
    %984 = vmatpush1.msra.mxu0 0.0
    %985 = vmatprep.subr.mxu0 0.0
    %986 = vmatpush1.msra.mxu0 0.0
    %987 = vmatprep.mubr.f32.mxu0 0.0
    %988 = vmatmul.mubr.f32.gmra.mrb[0].mxu0 %v890
    %v989 = vpop.f32.mrb[0].mxu0
    %v990 = vadd.f32 0.0, %v989
    %v991 = vpop.f32.mrb[0].mxu0
    %992 = vmatprep.mubr.f32.mxu0 0.0
    %993 = vmatmul.mubr.f32.gmra.mrb[0].mxu0 %v891
    %v994 = vpop.f32.mrb[0].mxu0
    %v995 = vadd.f32 0.0, %v994
    %v996 = vpop.f32.mrb[0].mxu0
    %997 = vmatprep.mubr.f32.mxu0 0.0
    %998 = vmatmul.mubr.f32.gmra.mrb[0].mxu0 %v892
    %v999 = vpop.f32.mrb[0].mxu0
    %v1000 = vadd.f32 0.0, %v999
    %v1001 = vpop.f32.mrb[0].mxu0
    %1002 = vmatprep.mubr.f32.mxu0 0.0
    %1003 = vmatmul.mubr.f32.gmra.mrb[0].mxu0 %v893
    %v1004 = vpop.f32.mrb[0].mxu0
    %v1005 = vadd.f32 0.0, %v1004
    %v1006 = vpop.f32.mrb[0].mxu0
    %1007 = vmatprep.mubr.f32.mxu0 0.0
    %1008 = vmatmul.mubr.f32.gmra.mrb[0].mxu0 %v894
    %v1009 = vpop.f32.mrb[0].mxu0
    %v1010 = vadd.f32 0.0, %v1009
    %v1011 = vpop.f32.mrb[0].mxu0
    %1012 = vmatprep.mubr.f32.mxu0 0.0
    %1013 = vmatmul.mubr.f32.gmra.mrb[0].mxu0 %v895
    %v1014 = vpop.f32.mrb[0].mxu0
    %v1015 = vadd.f32 0.0, %v1014
    %v1016 = vpop.f32.mrb[0].mxu0
    %1017 = vmatprep.mubr.f32.mxu0 0.0
    %1018 = vmatmul.mubr.f32.gmra.mrb[0].mxu0 %v896
    %v1019 = vpop.f32.mrb[0].mxu0
    %v1020 = vadd.f32 0.0, %v1019
    %v1021 = vpop.f32.mrb[0].mxu0
    %1022 = vmatprep.mubr.f32.mxu0 0.0
    %1023 = vmatmul.mubr.f32.gmra.mrb[0].mxu0 %v897
    %v1024 = vpop.f32.mrb[0].mxu0
    %v1025 = vadd.f32 0.0, %v1024
    %v1026 = vpop.f32.mrb[0].mxu0
    %1027 = vmatprep.mubr.f32.mxu0 0.0
    %1028 = vmatmul.mubr.f32.gmra.mrb[0].mxu0 %v898
    %v1029 = vpop.f32.mrb[0].mxu0
    %v1030 = vadd.f32 0.0, %v1029
    %v1031 = vpop.f32.mrb[0].mxu0
    %1032 = vmatprep.mubr.f32.mxu0 0.0
    %1033 = vmatmul.mubr.f32.gmra.mrb[0].mxu0 %v899
    %v1034 = vpop.f32.mrb[0].mxu0
    %v1035 = vadd.f32 0.0, %v1034
    %v1036 = vpop.f32.mrb[0].mxu0
    %1037 = vmatprep.mubr.f32.mxu0 0.0
    %1038 = vmatmul.mubr.f32.gmra.mrb[0].mxu0 %v900
    %v1039 = vpop.f32.mrb[0].mxu0
    %v1040 = vadd.f32 0.0, %v1039
    %v1041 = vpop.f32.mrb[0].mxu0
    %1042 = vmatprep.mubr.f32.mxu0 0.0
    %1043 = vmatmul.mubr.f32.gmra.mrb[0].mxu0 %v901
    %v1044 = vpop.f32.mrb[0].mxu0
    %v1045 = vadd.f32 0.0, %v1044
    %v1046 = vpop.f32.mrb[0].mxu0
    %1047 = vmatprep.mubr.f32.mxu0 0.0
    %1048 = vmatmul.mubr.f32.gmra.mrb[0].mxu0 %v902
    %v1049 = vpop.f32.mrb[0].mxu0
    %v1050 = vadd.f32 0.0, %v1049
    %v1051 = vpop.f32.mrb[0].mxu0
    %1052 = vmatprep.mubr.f32.mxu0 0.0
    %1053 = vmatmul.mubr.f32.gmra.mrb[0].mxu0 %v903
    %v1054 = vpop.f32.mrb[0].mxu0
    %v1055 = vadd.f32 0.0, %v1054
    %v1056 = vpop.f32.mrb[0].mxu0
    %1057 = vmatprep.mubr.f32.mxu0 0.0
    %1058 = vmatmul.mubr.f32.gmra.mrb[0].mxu0 %v904
    %v1059 = vpop.f32.mrb[0].mxu0
    %v1060 = vadd.f32 0.0, %v1059
    %v1061 = vpop.f32.mrb[0].mxu0
    %1062 = vmatprep.mubr.f32.mxu0 0.0
    %1063 = vmatmul.mubr.f32.gmra.mrb[0].mxu0 %v905
    %v1064 = vpop.f32.mrb[0].mxu0
    %v1065 = vadd.f32 0.0, %v1064
    %v1066 = vpop.f32.mrb[0].mxu0
    %1067 = vdwg.mxu0
    %v1068 = vadd.f32 %v990, %v995
    %v1069 = vadd.f32 %v1068, %v1000
    %v1070 = vadd.f32 %v1069, %v1005
    %v1071 = vadd.f32 %v1070, %v1010
    %v1072 = vadd.f32 %v1071, %v1015
    %v1073 = vadd.f32 %v1072, %v1020
    %v1074 = vadd.f32 %v1073, %v1025
    %v1075 = vadd.f32 %v1074, %v1030
    %v1076 = vadd.f32 %v1075, %v1035
    %v1077 = vadd.f32 %v1076, %v1040
    %v1078 = vadd.f32 %v1077, %v1045
    %v1079 = vadd.f32 %v1078, %v1050
    %v1080 = vadd.f32 %v1079, %v1055
    %v1081 = vadd.f32 %v1080, %v1060
    %v1082 = vadd.f32 %v1081, %v1065
    %v1083 = vrot.slane %v1082, 4
    %v1084 = vadd.f32 %v1082, %v1083
    %v1085 = vrot.slane %v1084, 2
    %v1086 = vadd.f32 %v1084, %v1085
    %v1087 = vrot.slane %v1086, 1
    %v1088 = vadd.f32 %v1086, %v1087
    %v1089 = vmul.f32 %v990, %v990
    %v1090 = vmul.f32 %v995, %v995
    %v1091 = vmul.f32 %v1000, %v1000
    %v1092 = vmul.f32 %v1005, %v1005
    %v1093 = vmul.f32 %v1010, %v1010
    %v1094 = vmul.f32 %v1015, %v1015
    %v1095 = vmul.f32 %v1020, %v1020
    %v1096 = vmul.f32 %v1025, %v1025
    %v1097 = vmul.f32 %v1030, %v1030
    %v1098 = vmul.f32 %v1035, %v1035
    %v1099 = vmul.f32 %v1040, %v1040
    %v1100 = vmul.f32 %v1045, %v1045
    %v1101 = vmul.f32 %v1050, %v1050
    %v1102 = vmul.f32 %v1055, %v1055
    %v1103 = vmul.f32 %v1060, %v1060
    %v1104 = vmul.f32 %v1065, %v1065
    %v1105 = vadd.f32 %v1089, %v1090
    %v1106 = vadd.f32 %v1105, %v1091
    %v1107 = vadd.f32 %v1106, %v1092
    %v1108 = vadd.f32 %v1107, %v1093
    %v1109 = vadd.f32 %v1108, %v1094
    %v1110 = vadd.f32 %v1109, %v1095
    %v1111 = vadd.f32 %v1110, %v1096
    %v1112 = vadd.f32 %v1111, %v1097
    %v1113 = vadd.f32 %v1112, %v1098
    %v1114 = vadd.f32 %v1113, %v1099
    %v1115 = vadd.f32 %v1114, %v1100
    %v1116 = vadd.f32 %v1115, %v1101
    %v1117 = vadd.f32 %v1116, %v1102
    %v1118 = vadd.f32 %v1117, %v1103
    %v1119 = vadd.f32 %v1118, %v1104
    %v1120 = vrot.slane %v1119, 4
    %v1121 = vadd.f32 %v1119, %v1120
    %v1122 = vrot.slane %v1121, 2
    %v1123 = vadd.f32 %v1121, %v1122
    %v1124 = vrot.slane %v1123, 1
    %v1125 = vadd.f32 %v1123, %v1124
    %v1126 = vmul.f32 %v1088, 0.0078125
    %v1127 = vmul.f32 %v1125, 0.0078125
    %v1128 = vmul.f32 %v1126, %v1126
    %v1129 = vsub.f32 %v1127, %v1128
    %v1130 = vsub.f32 %v990, %v1126
    %v1131 = vsub.f32 %v995, %v1126
    %v1132 = vsub.f32 %v1000, %v1126
    %v1133 = vsub.f32 %v1005, %v1126
    %v1134 = vsub.f32 %v1010, %v1126
    %v1135 = vsub.f32 %v1015, %v1126
    %v1136 = vsub.f32 %v1020, %v1126
    %v1137 = vsub.f32 %v1025, %v1126
    %v1138 = vsub.f32 %v1030, %v1126
    %v1139 = vsub.f32 %v1035, %v1126
    %v1140 = vsub.f32 %v1040, %v1126
    %v1141 = vsub.f32 %v1045, %v1126
    %v1142 = vsub.f32 %v1050, %v1126
    %v1143 = vsub.f32 %v1055, %v1126
    %v1144 = vsub.f32 %v1060, %v1126
    %v1145 = vsub.f32 %v1065, %v1126
    %v1146 = vadd.f32 %v1129, 1e-05
    %v1147 = vrsqrt.pop %v1146
    %v1148 = vmul.f32 %v1130, %v1147
    %v1149 = vmul.f32 %v1131, %v1147
    %v1150 = vmul.f32 %v1132, %v1147
    %v1151 = vmul.f32 %v1133, %v1147
    %v1152 = vmul.f32 %v1134, %v1147
    %v1153 = vmul.f32 %v1135, %v1147
    %v1154 = vmul.f32 %v1136, %v1147
    %v1155 = vmul.f32 %v1137, %v1147
    %v1156 = vmul.f32 %v1138, %v1147
    %v1157 = vmul.f32 %v1139, %v1147
    %v1158 = vmul.f32 %v1140, %v1147
    %v1159 = vmul.f32 %v1141, %v1147
    %v1160 = vmul.f32 %v1142, %v1147
    %v1161 = vmul.f32 %v1143, %v1147
    %v1162 = vmul.f32 %v1144, %v1147
    %v1163 = vmul.f32 %v1145, %v1147
    %v1164 = vmax.f32 %v1148, 0.0
    %v1165 = vmax.f32 %v1149, 0.0
    %v1166 = vmax.f32 %v1150, 0.0
    %v1167 = vmax.f32 %v1151, 0.0
    %v1168 = vmax.f32 %v1152, 0.0
    %v1169 = vmax.f32 %v1153, 0.0
    %v1170 = vmax.f32 %v1154, 0.0
    %v1171 = vmax.f32 %v1155, 0.0
    %v1172 = vmax.f32 %v1156, 0.0
    %v1173 = vmax.f32 %v1157, 0.0
    %v1174 = vmax.f32 %v1158, 0.0
    %v1175 = vmax.f32 %v1159, 0.0
    %v1176 = vmax.f32 %v1160, 0.0
    %v1177 = vmax.f32 %v1161, 0.0
    %v1178 = vmax.f32 %v1162, 0.0
    %v1179 = vmax.f32 %v1163, 0.0
    %s1180 = scalar_lea.vmem [#allocation2], 512
    %v1181 = vld [vmem:[%s1180] sm:$0xff]
    %v1182 = vld [vmem:[%s1180 + $0x8] sm:$0xff]
    %v1183 = vld [vmem:[%s1180 + $0x10] sm:$0xff]
    %v1184 = vld [vmem:[%s1180 + $0x18] sm:$0xff]
    %v1185 = vld [vmem:[%s1180 + $0x20] sm:$0xff]
    %v1186 = vld [vmem:[%s1180 + $0x28] sm:$0xff]
    %v1187 = vld [vmem:[%s1180 + $0x30] sm:$0xff]
    %v1188 = vld [vmem:[%s1180 + $0x38] sm:$0xff]
    %v1189 = vld [vmem:[%s1180 + $0x40] sm:$0xff]
    %v1190 = vld [vmem:[%s1180 + $0x48] sm:$0xff]
    %v1191 = vld [vmem:[%s1180 + $0x50] sm:$0xff]
    %v1192 = vld [vmem:[%s1180 + $0x58] sm:$0xff]
    %v1193 = vld [vmem:[%s1180 + $0x60] sm:$0xff]
    %v1194 = vld [vmem:[%s1180 + $0x68] sm:$0xff]
    %v1195 = vld [vmem:[%s1180 + $0x70] sm:$0xff]
    %v1196 = vld [vmem:[%s1180 + $0x78] sm:$0xff]
    %1197 = vmatprep.subr.mxu0 0.0
    %1198 = vmatpush1.msra.mxu0 %v1181
    %1199 = vmatprep.subr.mxu0 0.0
    %1200 = vmatpush1.msra.mxu0 %v1182
    %1201 = vmatprep.subr.mxu0 0.0
    %1202 = vmatpush1.msra.mxu0 %v1183
    %1203 = vmatprep.subr.mxu0 0.0
    %1204 = vmatpush1.msra.mxu0 %v1184
    %1205 = vmatprep.subr.mxu0 0.0
    %1206 = vmatpush1.msra.mxu0 %v1185
    %1207 = vmatprep.subr.mxu0 0.0
    %1208 = vmatpush1.msra.mxu0 %v1186
    %1209 = vmatprep.subr.mxu0 0.0
    %1210 = vmatpush1.msra.mxu0 %v1187
    %1211 = vmatprep.subr.mxu0 0.0
    %1212 = vmatpush1.msra.mxu0 %v1188
    %1213 = vmatprep.subr.mxu0 0.0
    %1214 = vmatpush1.msra.mxu0 %v1189
    %1215 = vmatprep.subr.mxu0 0.0
    %1216 = vmatpush1.msra.mxu0 %v1190
    %1217 = vmatprep.subr.mxu0 0.0
    %1218 = vmatpush1.msra.mxu0 %v1191
    %1219 = vmatprep.subr.mxu0 0.0
    %1220 = vmatpush1.msra.mxu0 %v1192
    %1221 = vmatprep.subr.mxu0 0.0
    %1222 = vmatpush1.msra.mxu0 %v1193
    %1223 = vmatprep.subr.mxu0 0.0
    %1224 = vmatpush1.msra.mxu0 %v1194
    %1225 = vmatprep.subr.mxu0 0.0
    %1226 = vmatpush1.msra.mxu0 %v1195
    %1227 = vmatprep.subr.mxu0 0.0
    %1228 = vmatpush1.msra.mxu0 %v1196
    %1229 = vmatprep.subr.mxu0 0.0
    %1230 = vmatpush1.msra.mxu0 0.0
    %1231 = vmatprep.subr.mxu0 0.0
    %1232 = vmatpush1.msra.mxu0 0.0
    %1233 = vmatprep.subr.mxu0 0.0
    %1234 = vmatpush1.msra.mxu0 0.0
    %1235 = vmatprep.subr.mxu0 0.0
    %1236 = vmatpush1.msra.mxu0 0.0
    %1237 = vmatprep.subr.mxu0 0.0
    %1238 = vmatpush1.msra.mxu0 0.0
    %1239 = vmatprep.subr.mxu0 0.0
    %1240 = vmatpush1.msra.mxu0 0.0
    %1241 = vmatprep.subr.mxu0 0.0
    %1242 = vmatpush1.msra.mxu0 0.0
    %1243 = vmatprep.subr.mxu0 0.0
    %1244 = vmatpush1.msra.mxu0 0.0
    %1245 = vmatprep.subr.mxu0 0.0
    %1246 = vmatpush1.msra.mxu0 0.0
    %1247 = vmatprep.subr.mxu0 0.0
    %1248 = vmatpush1.msra.mxu0 0.0
    %1249 = vmatprep.subr.mxu0 0.0
    %1250 = vmatpush1.msra.mxu0 0.0
    %1251 = vmatprep.subr.mxu0 0.0
    %1252 = vmatpush1.msra.mxu0 0.0
    %1253 = vmatprep.subr.mxu0 0.0
    %1254 = vmatpush1.msra.mxu0 0.0
    %1255 = vmatprep.subr.mxu0 0.0
    %1256 = vmatpush1.msra.mxu0 0.0
    %1257 = vmatprep.subr.mxu0 0.0
    %1258 = vmatpush1.msra.mxu0 0.0
    %1259 = vmatprep.subr.mxu0 0.0
    %1260 = vmatpush1.msra.mxu0 0.0
    %1261 = vmatprep.mubr.f32.mxu0 0.0
    %1262 = vmatmul.mubr.f32.gmra.mrb[0].mxu0 %v1164
    %v1263 = vpop.f32.mrb[0].mxu0
    %v1264 = vadd.f32 0.0, %v1263
    %v1265 = vpop.f32.mrb[0].mxu0
    %1266 = vmatprep.mubr.f32.mxu0 0.0
    %1267 = vmatmul.mubr.f32.gmra.mrb[0].mxu0 %v1165
    %v1268 = vpop.f32.mrb[0].mxu0
    %v1269 = vadd.f32 0.0, %v1268
    %v1270 = vpop.f32.mrb[0].mxu0
    %1271 = vmatprep.mubr.f32.mxu0 0.0
    %1272 = vmatmul.mubr.f32.gmra.mrb[0].mxu0 %v1166
    %v1273 = vpop.f32.mrb[0].mxu0
    %v1274 = vadd.f32 0.0, %v1273
    %v1275 = vpop.f32.mrb[0].mxu0
    %1276 = vmatprep.mubr.f32.mxu0 0.0
    %1277 = vmatmul.mubr.f32.gmra.mrb[0].mxu0 %v1167
    %v1278 = vpop.f32.mrb[0].mxu0
    %v1279 = vadd.f32 0.0, %v1278
    %v1280 = vpop.f32.mrb[0].mxu0
    %1281 = vmatprep.mubr.f32.mxu0 0.0
    %1282 = vmatmul.mubr.f32.gmra.mrb[0].mxu0 %v1168
    %v1283 = vpop.f32.mrb[0].mxu0
    %v1284 = vadd.f32 0.0, %v1283
    %v1285 = vpop.f32.mrb[0].mxu0
    %1286 = vmatprep.mubr.f32.mxu0 0.0
    %1287 = vmatmul.mubr.f32.gmra.mrb[0].mxu0 %v1169
    %v1288 = vpop.f32.mrb[0].mxu0
    %v1289 = vadd.f32 0.0, %v1288
    %v1290 = vpop.f32.mrb[0].mxu0
    %1291 = vmatprep.mubr.f32.mxu0 0.0
    %1292 = vmatmul.mubr.f32.gmra.mrb[0].mxu0 %v1170
    %v1293 = vpop.f32.mrb[0].mxu0
    %v1294 = vadd.f32 0.0, %v1293
    %v1295 = vpop.f32.mrb[0].mxu0
    %1296 = vmatprep.mubr.f32.mxu0 0.0
    %1297 = vmatmul.mubr.f32.gmra.mrb[0].mxu0 %v1171
    %v1298 = vpop.f32.mrb[0].mxu0
    %v1299 = vadd.f32 0.0, %v1298
    %v1300 = vpop.f32.mrb[0].mxu0
    %1301 = vmatprep.mubr.f32.mxu0 0.0
    %1302 = vmatmul.mubr.f32.gmra.mrb[0].mxu0 %v1172
    %v1303 = vpop.f32.mrb[0].mxu0
    %v1304 = vadd.f32 0.0, %v1303
    %v1305 = vpop.f32.mrb[0].mxu0
    %1306 = vmatprep.mubr.f32.mxu0 0.0
    %1307 = vmatmul.mubr.f32.gmra.mrb[0].mxu0 %v1173
    %v1308 = vpop.f32.mrb[0].mxu0
    %v1309 = vadd.f32 0.0, %v1308
    %v1310 = vpop.f32.mrb[0].mxu0
    %1311 = vmatprep.mubr.f32.mxu0 0.0
    %1312 = vmatmul.mubr.f32.gmra.mrb[0].mxu0 %v1174
    %v1313 = vpop.f32.mrb[0].mxu0
    %v1314 = vadd.f32 0.0, %v1313
    %v1315 = vpop.f32.mrb[0].mxu0
    %1316 = vmatprep.mubr.f32.mxu0 0.0
    %1317 = vmatmul.mubr.f32.gmra.mrb[0].mxu0 %v1175
    %v1318 = vpop.f32.mrb[0].mxu0
    %v1319 = vadd.f32 0.0, %v1318
    %v1320 = vpop.f32.mrb[0].mxu0
    %1321 = vmatprep.mubr.f32.mxu0 0.0
    %1322 = vmatmul.mubr.f32.gmra.mrb[0].mxu0 %v1176
    %v1323 = vpop.f32.mrb[0].mxu0
    %v1324 = vadd.f32 0.0, %v1323
    %v1325 = vpop.f32.mrb[0].mxu0
    %1326 = vmatprep.mubr.f32.mxu0 0.0
    %1327 = vmatmul.mubr.f32.gmra.mrb[0].mxu0 %v1177
    %v1328 = vpop.f32.mrb[0].mxu0
    %v1329 = vadd.f32 0.0, %v1328
    %v1330 = vpop.f32.mrb[0].mxu0
    %1331 = vmatprep.mubr.f32.mxu0 0.0
    %1332 = vmatmul.mubr.f32.gmra.mrb[0].mxu0 %v1178
    %v1333 = vpop.f32.mrb[0].mxu0
    %v1334 = vadd.f32 0.0, %v1333
    %v1335 = vpop.f32.mrb[0].mxu0
    %1336 = vmatprep.mubr.f32.mxu0 0.0
    %1337 = vmatmul.mubr.f32.gmra.mrb[0].mxu0 %v1179
    %v1338 = vpop.f32.mrb[0].mxu0
    %v1339 = vadd.f32 0.0, %v1338
    %v1340 = vpop.f32.mrb[0].mxu0
    %1341 = vdwg.mxu0
    %v1342 = vadd.f32 %v1264, %v1269
    %v1343 = vadd.f32 %v1342, %v1274
    %v1344 = vadd.f32 %v1343, %v1279
    %v1345 = vadd.f32 %v1344, %v1284
    %v1346 = vadd.f32 %v1345, %v1289
    %v1347 = vadd.f32 %v1346, %v1294
    %v1348 = vadd.f32 %v1347, %v1299
    %v1349 = vadd.f32 %v1348, %v1304
    %v1350 = vadd.f32 %v1349, %v1309
    %v1351 = vadd.f32 %v1350, %v1314
    %v1352 = vadd.f32 %v1351, %v1319
    %v1353 = vadd.f32 %v1352, %v1324
    %v1354 = vadd.f32 %v1353, %v1329
    %v1355 = vadd.f32 %v1354, %v1334
    %v1356 = vadd.f32 %v1355, %v1339
    %v1357 = vrot.slane %v1356, 4
    %v1358 = vadd.f32 %v1356, %v1357
    %v1359 = vrot.slane %v1358, 2
    %v1360 = vadd.f32 %v1358, %v1359
    %v1361 = vrot.slane %v1360, 1
    %v1362 = vadd.f32 %v1360, %v1361
    %v1363 = vmul.f32 %v1264, %v1264
    %v1364 = vmul.f32 %v1269, %v1269
    %v1365 = vmul.f32 %v1274, %v1274
    %v1366 = vmul.f32 %v1279, %v1279
    %v1367 = vmul.f32 %v1284, %v1284
    %v1368 = vmul.f32 %v1289, %v1289
    %v1369 = vmul.f32 %v1294, %v1294
    %v1370 = vmul.f32 %v1299, %v1299
    %v1371 = vmul.f32 %v1304, %v1304
    %v1372 = vmul.f32 %v1309, %v1309
    %v1373 = vmul.f32 %v1314, %v1314
    %v1374 = vmul.f32 %v1319, %v1319
    %v1375 = vmul.f32 %v1324, %v1324
    %v1376 = vmul.f32 %v1329, %v1329
    %v1377 = vmul.f32 %v1334, %v1334
    %v1378 = vmul.f32 %v1339, %v1339
    %v1379 = vadd.f32 %v1363, %v1364
    %v1380 = vadd.f32 %v1379, %v1365
    %v1381 = vadd.f32 %v1380, %v1366
    %v1382 = vadd.f32 %v1381, %v1367
    %v1383 = vadd.f32 %v1382, %v1368
    %v1384 = vadd.f32 %v1383, %v1369
    %v1385 = vadd.f32 %v1384, %v1370
    %v1386 = vadd.f32 %v1385, %v1371
    %v1387 = vadd.f32 %v1386, %v1372
    %v1388 = vadd.f32 %v1387, %v1373
    %v1389 = vadd.f32 %v1388, %v1374
    %v1390 = vadd.f32 %v1389, %v1375
    %v1391 = vadd.f32 %v1390, %v1376
    %v1392 = vadd.f32 %v1391, %v1377
    %v1393 = vadd.f32 %v1392, %v1378
    %v1394 = vrot.slane %v1393, 4
    %v1395 = vadd.f32 %v1393, %v1394
    %v1396 = vrot.slane %v1395, 2
    %v1397 = vadd.f32 %v1395, %v1396
    %v1398 = vrot.slane %v1397, 1
    %v1399 = vadd.f32 %v1397, %v1398
    %v1400 = vmul.f32 %v1362, 0.0078125
    %v1401 = vmul.f32 %v1399, 0.0078125
    %v1402 = vmul.f32 %v1400, %v1400
    %v1403 = vsub.f32 %v1401, %v1402
    %v1404 = vsub.f32 %v1264, %v1400
    %v1405 = vsub.f32 %v1269, %v1400
    %v1406 = vsub.f32 %v1274, %v1400
    %v1407 = vsub.f32 %v1279, %v1400
    %v1408 = vsub.f32 %v1284, %v1400
    %v1409 = vsub.f32 %v1289, %v1400
    %v1410 = vsub.f32 %v1294, %v1400
    %v1411 = vsub.f32 %v1299, %v1400
    %v1412 = vsub.f32 %v1304, %v1400
    %v1413 = vsub.f32 %v1309, %v1400
    %v1414 = vsub.f32 %v1314, %v1400
    %v1415 = vsub.f32 %v1319, %v1400
    %v1416 = vsub.f32 %v1324, %v1400
    %v1417 = vsub.f32 %v1329, %v1400
    %v1418 = vsub.f32 %v1334, %v1400
    %v1419 = vsub.f32 %v1339, %v1400
    %v1420 = vadd.f32 %v1403, 1e-05
    %v1421 = vrsqrt.pop %v1420
    %v1422 = vmul.f32 %v1404, %v1421
    %v1423 = vmul.f32 %v1405, %v1421
    %v1424 = vmul.f32 %v1406, %v1421
    %v1425 = vmul.f32 %v1407, %v1421
    %v1426 = vmul.f32 %v1408, %v1421
    %v1427 = vmul.f32 %v1409, %v1421
    %v1428 = vmul.f32 %v1410, %v1421
    %v1429 = vmul.f32 %v1411, %v1421
    %v1430 = vmul.f32 %v1412, %v1421
    %v1431 = vmul.f32 %v1413, %v1421
    %v1432 = vmul.f32 %v1414, %v1421
    %v1433 = vmul.f32 %v1415, %v1421
    %v1434 = vmul.f32 %v1416, %v1421
    %v1435 = vmul.f32 %v1417, %v1421
    %v1436 = vmul.f32 %v1418, %v1421
    %v1437 = vmul.f32 %v1419, %v1421
    %v1438 = vmax.f32 %v1422, 0.0
    %v1439 = vmax.f32 %v1423, 0.0
    %v1440 = vmax.f32 %v1424, 0.0
    %v1441 = vmax.f32 %v1425, 0.0
    %v1442 = vmax.f32 %v1426, 0.0
    %v1443 = vmax.f32 %v1427, 0.0
    %v1444 = vmax.f32 %v1428, 0.0
    %v1445 = vmax.f32 %v1429, 0.0
    %v1446 = vmax.f32 %v1430, 0.0
    %v1447 = vmax.f32 %v1431, 0.0
    %v1448 = vmax.f32 %v1432, 0.0
    %v1449 = vmax.f32 %v1433, 0.0
    %v1450 = vmax.f32 %v1434, 0.0
    %v1451 = vmax.f32 %v1435, 0.0
    %v1452 = vmax.f32 %v1436, 0.0
    %v1453 = vmax.f32 %v1437, 0.0
    %s1454 = scalar_lea.vmem [#allocation2], 640
    %v1455 = vld [vmem:[%s1454] sm:$0xff]
    %v1456 = vld [vmem:[%s1454 + $0x8] sm:$0xff]
    %v1457 = vld [vmem:[%s1454 + $0x10] sm:$0xff]
    %v1458 = vld [vmem:[%s1454 + $0x18] sm:$0xff]
    %v1459 = vld [vmem:[%s1454 + $0x20] sm:$0xff]
    %v1460 = vld [vmem:[%s1454 + $0x28] sm:$0xff]
    %v1461 = vld [vmem:[%s1454 + $0x30] sm:$0xff]
    %v1462 = vld [vmem:[%s1454 + $0x38] sm:$0xff]
    %v1463 = vld [vmem:[%s1454 + $0x40] sm:$0xff]
    %v1464 = vld [vmem:[%s1454 + $0x48] sm:$0xff]
    %v1465 = vld [vmem:[%s1454 + $0x50] sm:$0xff]
    %v1466 = vld [vmem:[%s1454 + $0x58] sm:$0xff]
    %v1467 = vld [vmem:[%s1454 + $0x60] sm:$0xff]
    %v1468 = vld [vmem:[%s1454 + $0x68] sm:$0xff]
    %v1469 = vld [vmem:[%s1454 + $0x70] sm:$0xff]
    %v1470 = vld [vmem:[%s1454 + $0x78] sm:$0xff]
    %v1471 = vld [vmem:[%s2] sm:$0x1]
    %v1473 = vlaneseq
    %v1474 = vshrl.u32 %v1473, 7
    %v1475 = vsub.s32 0, %v1474
    %v1476 = vrot.slane %v1471, %v1475
    %1478 = vmatprep.subr.mxu0 0.0
    %1479 = vmatpush1.msra.mxu0 %v1455
    %1480 = vmatprep.subr.mxu0 0.0
    %1481 = vmatpush1.msra.mxu0 %v1456
    %1482 = vmatprep.subr.mxu0 0.0
    %1483 = vmatpush1.msra.mxu0 %v1457
    %1484 = vmatprep.subr.mxu0 0.0
    %1485 = vmatpush1.msra.mxu0 %v1458
    %1486 = vmatprep.subr.mxu0 0.0
    %1487 = vmatpush1.msra.mxu0 %v1459
    %1488 = vmatprep.subr.mxu0 0.0
    %1489 = vmatpush1.msra.mxu0 %v1460
    %1490 = vmatprep.subr.mxu0 0.0
    %1491 = vmatpush1.msra.mxu0 %v1461
    %1492 = vmatprep.subr.mxu0 0.0
    %1493 = vmatpush1.msra.mxu0 %v1462
    %1494 = vmatprep.subr.mxu0 0.0
    %1495 = vmatpush1.msra.mxu0 %v1463
    %1496 = vmatprep.subr.mxu0 0.0
    %1497 = vmatpush1.msra.mxu0 %v1464
    %1498 = vmatprep.subr.mxu0 0.0
    %1499 = vmatpush1.msra.mxu0 %v1465
    %1500 = vmatprep.subr.mxu0 0.0
    %1501 = vmatpush1.msra.mxu0 %v1466
    %1502 = vmatprep.subr.mxu0 0.0
    %1503 = vmatpush1.msra.mxu0 %v1467
    %1504 = vmatprep.subr.mxu0 0.0
    %1505 = vmatpush1.msra.mxu0 %v1468
    %1506 = vmatprep.subr.mxu0 0.0
    %1507 = vmatpush1.msra.mxu0 %v1469
    %1508 = vmatprep.subr.mxu0 0.0
    %1509 = vmatpush1.msra.mxu0 %v1470
    %1510 = vmatprep.subr.mxu0 0.0
    %1511 = vmatpush1.msra.mxu0 0.0
    %1512 = vmatprep.subr.mxu0 0.0
    %1513 = vmatpush1.msra.mxu0 0.0
    %1514 = vmatprep.subr.mxu0 0.0
    %1515 = vmatpush1.msra.mxu0 0.0
    %1516 = vmatprep.subr.mxu0 0.0
    %1517 = vmatpush1.msra.mxu0 0.0
    %1518 = vmatprep.subr.mxu0 0.0
    %1519 = vmatpush1.msra.mxu0 0.0
    %1520 = vmatprep.subr.mxu0 0.0
    %1521 = vmatpush1.msra.mxu0 0.0
    %1522 = vmatprep.subr.mxu0 0.0
    %1523 = vmatpush1.msra.mxu0 0.0
    %1524 = vmatprep.subr.mxu0 0.0
    %1525 = vmatpush1.msra.mxu0 0.0
    %1526 = vmatprep.subr.mxu0 0.0
    %1527 = vmatpush1.msra.mxu0 0.0
    %1528 = vmatprep.subr.mxu0 0.0
    %1529 = vmatpush1.msra.mxu0 0.0
    %1530 = vmatprep.subr.mxu0 0.0
    %1531 = vmatpush1.msra.mxu0 0.0
    %1532 = vmatprep.subr.mxu0 0.0
    %1533 = vmatpush1.msra.mxu0 0.0
    %1534 = vmatprep.subr.mxu0 0.0
    %1535 = vmatpush1.msra.mxu0 0.0
    %1536 = vmatprep.subr.mxu0 0.0
    %1537 = vmatpush1.msra.mxu0 0.0
    %1538 = vmatprep.subr.mxu0 0.0
    %1539 = vmatpush1.msra.mxu0 0.0
    %1540 = vmatprep.subr.mxu0 0.0
    %1541 = vmatpush1.msra.mxu0 0.0
    %1542 = vmatprep.mubr.f32.mxu0 0.0
    %1543 = vmatmul.mubr.f32.gmra.mrb[0].mxu0 %v1438
    %v1544 = vpop.f32.mrb[0].mxu0
    %v1545 = vadd.f32 %v1476, %v1544
    %v1546 = vpop.f32.mrb[0].mxu0
    %1547 = vmatprep.mubr.f32.mxu0 0.0
    %1548 = vmatmul.mubr.f32.gmra.mrb[0].mxu0 %v1439
    %v1549 = vpop.f32.mrb[0].mxu0
    %v1550 = vadd.f32 %v1476, %v1549
    %v1551 = vpop.f32.mrb[0].mxu0
    %1552 = vmatprep.mubr.f32.mxu0 0.0
    %1553 = vmatmul.mubr.f32.gmra.mrb[0].mxu0 %v1440
    %v1554 = vpop.f32.mrb[0].mxu0
    %v1555 = vadd.f32 %v1476, %v1554
    %v1556 = vpop.f32.mrb[0].mxu0
    %1557 = vmatprep.mubr.f32.mxu0 0.0
    %1558 = vmatmul.mubr.f32.gmra.mrb[0].mxu0 %v1441
    %v1559 = vpop.f32.mrb[0].mxu0
    %v1560 = vadd.f32 %v1476, %v1559
    %v1561 = vpop.f32.mrb[0].mxu0
    %1562 = vmatprep.mubr.f32.mxu0 0.0
    %1563 = vmatmul.mubr.f32.gmra.mrb[0].mxu0 %v1442
    %v1564 = vpop.f32.mrb[0].mxu0
    %v1565 = vadd.f32 %v1476, %v1564
    %v1566 = vpop.f32.mrb[0].mxu0
    %1567 = vmatprep.mubr.f32.mxu0 0.0
    %1568 = vmatmul.mubr.f32.gmra.mrb[0].mxu0 %v1443
    %v1569 = vpop.f32.mrb[0].mxu0
    %v1570 = vadd.f32 %v1476, %v1569
    %v1571 = vpop.f32.mrb[0].mxu0
    %1572 = vmatprep.mubr.f32.mxu0 0.0
    %1573 = vmatmul.mubr.f32.gmra.mrb[0].mxu0 %v1444
    %v1574 = vpop.f32.mrb[0].mxu0
    %v1575 = vadd.f32 %v1476, %v1574
    %v1576 = vpop.f32.mrb[0].mxu0
    %1577 = vmatprep.mubr.f32.mxu0 0.0
    %1578 = vmatmul.mubr.f32.gmra.mrb[0].mxu0 %v1445
    %v1579 = vpop.f32.mrb[0].mxu0
    %v1580 = vadd.f32 %v1476, %v1579
    %v1581 = vpop.f32.mrb[0].mxu0
    %1582 = vmatprep.mubr.f32.mxu0 0.0
    %1583 = vmatmul.mubr.f32.gmra.mrb[0].mxu0 %v1446
    %v1584 = vpop.f32.mrb[0].mxu0
    %v1585 = vadd.f32 %v1476, %v1584
    %v1586 = vpop.f32.mrb[0].mxu0
    %1587 = vmatprep.mubr.f32.mxu0 0.0
    %1588 = vmatmul.mubr.f32.gmra.mrb[0].mxu0 %v1447
    %v1589 = vpop.f32.mrb[0].mxu0
    %v1590 = vadd.f32 %v1476, %v1589
    %v1591 = vpop.f32.mrb[0].mxu0
    %1592 = vmatprep.mubr.f32.mxu0 0.0
    %1593 = vmatmul.mubr.f32.gmra.mrb[0].mxu0 %v1448
    %v1594 = vpop.f32.mrb[0].mxu0
    %v1595 = vadd.f32 %v1476, %v1594
    %v1596 = vpop.f32.mrb[0].mxu0
    %1597 = vmatprep.mubr.f32.mxu0 0.0
    %1598 = vmatmul.mubr.f32.gmra.mrb[0].mxu0 %v1449
    %v1599 = vpop.f32.mrb[0].mxu0
    %v1600 = vadd.f32 %v1476, %v1599
    %v1601 = vpop.f32.mrb[0].mxu0
    %1602 = vmatprep.mubr.f32.mxu0 0.0
    %1603 = vmatmul.mubr.f32.gmra.mrb[0].mxu0 %v1450
    %v1604 = vpop.f32.mrb[0].mxu0
    %v1605 = vadd.f32 %v1476, %v1604
    %v1606 = vpop.f32.mrb[0].mxu0
    %1607 = vmatprep.mubr.f32.mxu0 0.0
    %1608 = vmatmul.mubr.f32.gmra.mrb[0].mxu0 %v1451
    %v1609 = vpop.f32.mrb[0].mxu0
    %v1610 = vadd.f32 %v1476, %v1609
    %v1611 = vpop.f32.mrb[0].mxu0
    %1612 = vmatprep.mubr.f32.mxu0 0.0
    %1613 = vmatmul.mubr.f32.gmra.mrb[0].mxu0 %v1452
    %v1614 = vpop.f32.mrb[0].mxu0
    %v1615 = vadd.f32 %v1476, %v1614
    %v1616 = vpop.f32.mrb[0].mxu0
    %1617 = vmatprep.mubr.f32.mxu0 0.0
    %1618 = vmatmul.mubr.f32.gmra.mrb[0].mxu0 %v1453
    %v1619 = vpop.f32.mrb[0].mxu0
    %v1620 = vadd.f32 %v1476, %v1619
    %v1621 = vpop.f32.mrb[0].mxu0
    %1622 = vdwg.mxu0
    %1623 = vst [vmem:[%s3] sm:$0xff] %v1545
    %1624 = vst [vmem:[%s3 + $0x8] sm:$0xff] %v1550
    %1625 = vst [vmem:[%s3 + $0x10] sm:$0xff] %v1555
    %1626 = vst [vmem:[%s3 + $0x18] sm:$0xff] %v1560
    %1627 = vst [vmem:[%s3 + $0x20] sm:$0xff] %v1565
    %1628 = vst [vmem:[%s3 + $0x28] sm:$0xff] %v1570
    %1629 = vst [vmem:[%s3 + $0x30] sm:$0xff] %v1575
    %1630 = vst [vmem:[%s3 + $0x38] sm:$0xff] %v1580
    %1631 = vst [vmem:[%s3 + $0x40] sm:$0xff] %v1585
    %1632 = vst [vmem:[%s3 + $0x48] sm:$0xff] %v1590
    %1633 = vst [vmem:[%s3 + $0x50] sm:$0xff] %v1595
    %1634 = vst [vmem:[%s3 + $0x58] sm:$0xff] %v1600
    %1635 = vst [vmem:[%s3 + $0x60] sm:$0xff] %v1605
    %1636 = vst [vmem:[%s3 + $0x68] sm:$0xff] %v1610
    %1637 = vst [vmem:[%s3 + $0x70] sm:$0xff] %v1615
    %1638 = vst [vmem:[%s3 + $0x78] sm:$0xff] %v1620
    // Predicated region
    $region18: #{feedforward_ae_forward.1} parent=1 // pred_check
      _
    $region19: #{feedforward_ae_forward.1} parent=1 // pred_check_branch
      %1640 = sbr.rel (0) target = $region21
    $region20: #{feedforward_ae_forward.1} parent=1 // pred_region
      _
    $region21: #{feedforward_ae_forward.1} parent=1 // pred_fallthru
      _
    // Predicated region
    $region22: #{feedforward_ae_forward.1} parent=1 // pred_check
      _
    $region23: #{feedforward_ae_forward.1} parent=1 // pred_check_branch
      %1642 = sbr.rel (0) target = $region25
    $region24: #{feedforward_ae_forward.1} parent=1 // pred_region
      _
    $region25: #{feedforward_ae_forward.1} parent=1 // pred_fallthru
      _
    %1643 = vsyncpa [#allocation3], 1

</llo_original>
